<compile_context>
chip_gen: v5e
topology: v5e:2x2
jax: 0.10.0
libtpu: 0.0.40
codegen_flags: <defaults>
</compile_context>

<pallas_src>
import functools
import math

import jax
import jax.numpy as jnp
from jax import lax
from jax.experimental import pallas as pl
from jax.experimental.pallas import tpu as pltpu

D_MODEL = 32                      # d_model
EMBED = 2 * D_MODEL               # cross-attention embed dim (64)
NUM_HEADS = 16
HEAD_DIM = EMBED // NUM_HEADS     # 4
AUG = 40                          # augmented input width: [feats(32)|xyz(3)|pad|1]
OUT_PAD = 128                     # lane-dense padded output width (true width = 6)
LN_EPS = 1e-5

# Row offsets inside the two packed weight slabs (all matrix offsets are
# multiples of 8 so static slices stay sublane-tile aligned).
_S64_WQ, _S64_W1, _S64_W2 = 0, 40, 104
_S64_B1, _S64_G1, _S64_BE1 = 168, 169, 170
_S64_B2, _S64_G2, _S64_BE2 = 171, 172, 173
_S64_HMASK = 176
_S128_WKV, _S128_W3, _S128_B3 = 0, 40, 72
_S128_ROWS = 80


# -----------------------------------------------------------------------------
# Pallas kernel: BBoxHead forward for `bt` batch elements per grid step.
# -----------------------------------------------------------------------------
def _bbox_head_kernel(q_ref, kv_ref, mask_ref, s64_ref, s128_ref, out_ref,
                      *, bt, Lq, Lk):
    f32 = jnp.float32
    d, e, H, hd = D_MODEL, EMBED, NUM_HEADS, HEAD_DIM
    R0 = H * Lq                    # head-expanded query rows per batch element
    nq = bt * Lq

    # ---- static slices out of the two packed weight slabs -------------------
    wq = s64_ref[_S64_WQ:_S64_WQ + AUG, :]            # (40, 64)  Q in-proj (+bias row)
    w1 = s64_ref[_S64_W1:_S64_W1 + e, :]              # (64, 64)  w_o @ w1 fused
    w2 = s64_ref[_S64_W2:_S64_W2 + e, :]              # (64, 64)  cols >= 32 are zero
    b1 = s64_ref[_S64_B1:_S64_B1 + 1, :]
    g1 = s64_ref[_S64_G1:_S64_G1 + 1, :]
    be1 = s64_ref[_S64_BE1:_S64_BE1 + 1, :]
    b2 = s64_ref[_S64_B2:_S64_B2 + 1, :]
    g2 = s64_ref[_S64_G2:_S64_G2 + 1, :]
    be2 = s64_ref[_S64_BE2:_S64_BE2 + 1, :]
    hmask = s64_ref[_S64_HMASK:_S64_HMASK + R0, :]    # (R0, 64) head-block mask

    wkv = s128_ref[_S128_WKV:_S128_WKV + AUG, :]      # (40, 128) K|V fused (+bias row)
    w3 = s128_ref[_S128_W3:_S128_W3 + d, :]           # (32, 128) padded final layer
    b3 = s128_ref[_S128_B3:_S128_B3 + 1, :]           # (1, 128)

    # ---- fused in-projections (biases folded in via the ones column) --------
    Q = jnp.dot(q_ref[...], wq, preferred_element_type=f32)        # (nq, 64)
    KV = jnp.dot(kv_ref[...], wkv, preferred_element_type=f32)     # (bt*Lk, 128)
    K = KV[:, :e].reshape(bt, Lk, e)
    V = KV[:, e:].reshape(bt, Lk, e)

    # ---- multi-head cross attention: heads on the sublane axis, batch kept
    #      as a dot_general batch dim (no bt**2 score-matrix waste) -----------
    Qrep = jnp.tile(Q.reshape(bt, Lq, e), (1, H, 1))                # (bt, R0, 64)
    Qexp = Qrep * hmask                                             # mask per head

    S = jnp.einsum("bre,bke->brk", Qexp, K,
                   preferred_element_type=f32) * (1.0 / math.sqrt(hd))
    S = S + mask_ref[...]                       # key-padding mask, per batch block
    S = S - jnp.max(S, axis=-1, keepdims=True)
    P = jnp.exp(S)
    P = P * pl.reciprocal(jnp.sum(P, axis=-1, keepdims=True), approx=True)

    O = jnp.einsum("brk,bke->bre", P, V, preferred_element_type=f32) * hmask
    attn = O.reshape(bt, H, Lq, e).sum(axis=1).reshape(nq, e)       # concat heads

    # ---- bbox predictor MLP (attention out-projection already fused into w1)
    def layernorm(x, g, b):
        mu = jnp.mean(x, axis=-1, keepdims=True)
        var = jnp.mean((x - mu) ** 2, axis=-1, keepdims=True)
        return (x - mu) * lax.rsqrt(var + LN_EPS) * g + b

    h1 = jnp.dot(attn, w1, preferred_element_type=f32) + b1
    h1 = jnp.maximum(layernorm(h1, g1, be1), 0.0)
    h2 = jnp.dot(h1, w2, preferred_element_type=f32)[:, :d] + b2[:, :d]
    h2 = jnp.maximum(layernorm(h2, g2[:, :d], be2[:, :d]), 0.0)
    pred = jnp.dot(h2, w3, preferred_element_type=f32) + b3          # (nq, 128)

    # center (cols 0..2) passthrough, softplus on the rest: full-vreg select,
    # lane-dense 128-wide store (padded cols are sliced off host-side).
    out_col = lax.broadcasted_iota(jnp.int32, pred.shape, 1)
    res = jnp.where(out_col >= 3, jnp.logaddexp(pred, 0.0), pred)
    out_ref[...] = res.astype(out_ref.dtype)


# -----------------------------------------------------------------------------
# Host-side weight fusion / packing (exact linear-algebra rewrites)
# -----------------------------------------------------------------------------
def _prepare_weights(p, Lq):
    f32 = jnp.float32
    d, e = D_MODEL, EMBED
    H, hd = NUM_HEADS, HEAD_DIM
    R0 = H * Lq

    # Q path: query_projector folded into the attention Q in-projection;
    # bias carried on the ones-column row of the augmented weight.
    w_q_f = p["w_qproj"] @ p["w_q"]                          # (32, 64)
    b_q_f = p["b_qproj"] @ p["w_q"] + p["b_q"]               # (64,)
    wq_aug = (jnp.zeros((AUG, e), f32)
              .at[:d].set(w_q_f).at[AUG - 1].set(b_q_f))

    # K/V path: xyz projector folded in, K|V columns fused, bias on ones row.
    wk_f, wk_x = p["w_k"][:d], p["w_xyz"] @ p["w_k"][d:]
    wv_f, wv_x = p["w_v"][:d], p["w_xyz"] @ p["w_v"][d:]
    bk = p["b_xyz"] @ p["w_k"][d:] + p["b_k"]
    bv = p["b_xyz"] @ p["w_v"][d:] + p["b_v"]
    wkv_aug = (jnp.zeros((AUG, 2 * e), f32)
               .at[:d, :e].set(wk_f).at[:d, e:].set(wv_f)
               .at[d:d + 3, :e].set(wk_x).at[d:d + 3, e:].set(wv_x)
               .at[AUG - 1, :e].set(bk).at[AUG - 1, e:].set(bv))

    # Attention out-projection fused into the first MLP layer (no nonlinearity
    # in between): w1' = w_o @ w1, b1' = b_o @ w1 + b1.
    w1_f = p["w_o"] @ p["w1"]                                # (64, 64)
    b1_f = p["b_o"] @ p["w1"] + p["b1"]                      # (64,)

    w2_pad = jnp.zeros((e, e), f32).at[:, :d].set(p["w2"])   # (64, 64)
    w3_pad = jnp.zeros((d, OUT_PAD), f32).at[:, :6].set(p["w3"])
    b3_pad = jnp.zeros((OUT_PAD,), f32).at[:6].set(p["b3"])

    def pad64(v):
        return jnp.zeros((e,), f32).at[:v.shape[0]].set(v)

    # Grid-invariant head-block mask, hoisted out of the kernel.
    row_h = jnp.arange(R0)[:, None] // Lq
    col_h = jnp.arange(e)[None, :] // hd
    hmask = (row_h == col_h).astype(f32)                     # (R0, 64)

    slab64 = (jnp.zeros((_S64_HMASK + R0, e), f32)
              .at[_S64_WQ:_S64_WQ + AUG].set(wq_aug)
              .at[_S64_W1:_S64_W1 + e].set(w1_f)
              .at[_S64_W2:_S64_W2 + e].set(w2_pad)
              .at[_S64_B1].set(b1_f)
              .at[_S64_G1].set(p["g1"])
              .at[_S64_BE1].set(p["be1"])
              .at[_S64_B2].set(pad64(p["b2"]))
              .at[_S64_G2].set(pad64(p["g2"]))
              .at[_S64_BE2].set(pad64(p["be2"]))
              .at[_S64_HMASK:_S64_HMASK + R0].set(hmask))

    slab128 = (jnp.zeros((_S128_ROWS, OUT_PAD), f32)
               .at[_S128_WKV:_S128_WKV + AUG].set(wkv_aug)
               .at[_S128_W3:_S128_W3 + d].set(w3_pad)
               .at[_S128_B3].set(b3_pad))
    return slab64, slab128


def _pick_block_b(B, Lq, target_rows=256, min_steps=1):
    """Fold batch elements per grid step. min_steps=1 on single-TC v5e/v6e
    (grid is a serial loop, so fewer steps = less fixed overhead); pass
    min_steps=2 on v7x so both TensorCores get grid steps."""
    bt = 1
    for cand in range(1, B + 1):
        if B % cand:
            continue
        if cand * Lq > target_rows:
            break
        if B // cand < min_steps:
            break
        bt = cand
    return bt


# -----------------------------------------------------------------------------
# Wrapper
# -----------------------------------------------------------------------------
def bbox_head_forward(params, query_feats, ptc_feats, ptc_xyz, ptc_mask=None,
                      block_b=None, min_steps=1, target_rows=256):
    B, Lq, d = query_feats.shape
    _, Lk, _ = ptc_feats.shape
    assert d == D_MODEL
    f32 = jnp.float32

    bt = (_pick_block_b(B, Lq, target_rows=target_rows, min_steps=min_steps)
          if block_b is None else block_b)
    assert B % bt == 0
    if bt != B and ((bt * Lq) % 8 or (bt * Lk) % 8):
        bt = B   # keep partial blocks sublane-tile aligned; fall back to 1 step

    nq_all, nk_all = B * Lq, B * Lk

    # Pre-flattened, augmented 2-D data operands (ones column folds the biases,
    # xyz concatenated onto the point features -> single K|V matmul in-kernel).
    q2d = (jnp.zeros((nq_all, AUG), f32)
           .at[:, :d].set(query_feats.reshape(nq_all, d))
           .at[:, AUG - 1].set(1.0))
    kv2d = (jnp.zeros((nk_all, AUG), f32)
            .at[:, :d].set(ptc_feats.reshape(nk_all, d))
            .at[:, d:d + 3].set(ptc_xyz.reshape(nk_all, 3))
            .at[:, AUG - 1].set(1.0))

    if ptc_mask is None:
        mask_add = jnp.zeros((B, 1, Lk), f32)
    else:
        mask_add = jnp.where(ptc_mask, -1e9, 0.0).astype(f32)[:, None, :]

    slab64, slab128 = _prepare_weights(params, Lq)

    kernel = functools.partial(_bbox_head_kernel, bt=bt, Lq=Lq, Lk=Lk)

    out2d = pl.pallas_call(
        kernel,
        out_shape=jax.ShapeDtypeStruct((nq_all, OUT_PAD), f32),
        grid_spec=pltpu.PrefetchScalarGridSpec(
            num_scalar_prefetch=0,
            grid=(B // bt,),
            in_specs=[
                pl.BlockSpec((bt * Lq, AUG), lambda b: (b, 0)),
                pl.BlockSpec((bt * Lk, AUG), lambda b: (b, 0)),
                pl.BlockSpec((bt, 1, Lk), lambda b: (b, 0, 0)),
                pl.BlockSpec(slab64.shape, lambda b: (0, 0)),
                pl.BlockSpec(slab128.shape, lambda b: (0, 0)),
            ],
            out_specs=pl.BlockSpec((bt * Lq, OUT_PAD), lambda b: (b, 0)),
        ),
        compiler_params=pltpu.CompilerParams(
            dimension_semantics=("parallel",)),
    )(q2d, kv2d, mask_add, slab64, slab128)

    return out2d[:, :6].reshape(B, Lq, 6)


# -----------------------------------------------------------------------------
# Deterministic parameter init (original module parameterization)
# -----------------------------------------------------------------------------
def init_params(key):
    d, e = D_MODEL, EMBED
    specs = {
        "w_qproj": (d, e), "b_qproj": (e,),
        "w_xyz": (3, d), "b_xyz": (d,),
        "w_q": (e, e), "b_q": (e,),
        "w_k": (e, e), "b_k": (e,),
        "w_v": (e, e), "b_v": (e,),
        "w_o": (e, e), "b_o": (e,),
        "w1": (e, e), "b1": (e,), "g1": (e,), "be1": (e,),
        "w2": (e, d), "b2": (d,), "g2": (d,), "be2": (d,),
        "w3": (d, 6), "b3": (6,),
    }
    params = {}
    keys = jax.random.split(key, len(specs))
    for k_rand, (name, shape) in zip(keys, specs.items()):
        if name.startswith("g"):          # LayerNorm gamma ~ 1
            params[name] = 1.0 + 0.05 * jax.random.normal(k_rand, shape, jnp.float32)
        elif name[0] == "b":              # biases / betas
            params[name] = 0.02 * jax.random.normal(k_rand, shape, jnp.float32)
        else:                             # weights
            params[name] = 0.05 * jax.random.normal(k_rand, shape, jnp.float32)
    return params


# -----------------------------------------------------------------------------
# Pure-JAX reference (unfused original math) for a correctness check
# -----------------------------------------------------------------------------
def reference(params, q, f, xyz, mask_add):
    p = params
    qp = q @ p["w_qproj"] + p["b_qproj"]
    xp = xyz @ p["w_xyz"] + p["b_xyz"]
    kv = jnp.concatenate([f, xp], axis=-1)
    Q = qp @ p["w_q"] + p["b_q"]
    K = kv @ p["w_k"] + p["b_k"]
    V = kv @ p["w_v"] + p["b_v"]
    B, Lq, E = Q.shape
    Lk = K.shape[1]
    Qh = Q.reshape(B, Lq, NUM_HEADS, HEAD_DIM).transpose(0, 2, 1, 3)
    Kh = K.reshape(B, Lk, NUM_HEADS, HEAD_DIM).transpose(0, 2, 1, 3)
    Vh = V.reshape(B, Lk, NUM_HEADS, HEAD_DIM).transpose(0, 2, 1, 3)
    S = jnp.einsum("bhqd,bhkd->bhqk", Qh, Kh) / math.sqrt(HEAD_DIM)
    S = S + mask_add[:, None, :, :]
    P = jax.nn.softmax(S, axis=-1)
    O = jnp.einsum("bhqk,bhkd->bhqd", P, Vh).transpose(0, 2, 1, 3).reshape(B, Lq, E)
    O = O @ p["w_o"] + p["b_o"]

    def ln(x, g, b):
        mu = jnp.mean(x, axis=-1, keepdims=True)
        var = jnp.mean((x - mu) ** 2, axis=-1, keepdims=True)
        return (x - mu) / jnp.sqrt(var + LN_EPS) * g + b

    h1 = jnp.maximum(ln(O @ p["w1"] + p["b1"], p["g1"], p["be1"]), 0.0)
    h2 = jnp.maximum(ln(h1 @ p["w2"] + p["b2"], p["g2"], p["be2"]), 0.0)
    pred = h2 @ p["w3"] + p["b3"]
    return jnp.concatenate([pred[..., :3], jax.nn.softplus(pred[..., 3:])], axis=-1)


if __name__ == "__main__":
    B, Lq, Lk = 2, 8, 16

    key = jax.random.PRNGKey(0)
    k_p, k_q, k_f, k_x = jax.random.split(key, 4)

    params = init_params(k_p)
    query_feats = jax.random.normal(k_q, (B, Lq, D_MODEL), jnp.float32)
    ptc_feats = jax.random.normal(k_f, (B, Lk, D_MODEL), jnp.float32)
    ptc_xyz = jax.random.normal(k_x, (B, Lk, 3), jnp.float32)
    # key_padding_mask: True = ignore that point (last 4 points of batch 0)
    ptc_mask = jnp.zeros((B, Lk), bool).at[0, -4:].set(True)

    out = bbox_head_forward(params, query_feats, ptc_feats, ptc_xyz, ptc_mask)
    out = jax.block_until_ready(out)

    mask_add = jnp.where(ptc_mask, -1e9, 0.0).astype(jnp.float32)[:, None, :]
    ref = reference(params, query_feats, ptc_feats, ptc_xyz, mask_add)
    assert out.shape == (B, Lq, 6)
    # Tolerance accounts for host-side linear-layer fusion and the approximate
    # EUP reciprocal used in the softmax denominator.
    assert jnp.allclose(out, ref, rtol=2e-3, atol=2e-3), "mismatch vs reference"

    print("KERNEL_OK")
</pallas_src>

<mosaic_0001>
module attributes {stable_mosaic.version = 11 : i64} {
  func.func @_bbox_head_kernel(%arg0: i32, %arg1: memref<16x40xf32, #tpu.memory_space<vmem>>, %arg2: memref<32x40xf32, #tpu.memory_space<vmem>>, %arg3: memref<2x1x16xf32, #tpu.memory_space<vmem>>, %arg4: memref<304x64xf32, #tpu.memory_space<vmem>>, %arg5: memref<80x128xf32, #tpu.memory_space<vmem>>, %arg6: memref<16x128xf32, #tpu.memory_space<vmem>>) attributes {dimension_semantics = [#tpu.dimension_semantics<parallel>], iteration_bounds = array<i64: 1>, scalar_prefetch = 0 : i64, scratch_operands = 0 : i64, tpu.core_type = #tpu.core_type<tc>, window_params = [{transform_indices = @transform_0, window_bounds = array<i64: 16, 40>}, {transform_indices = @transform_1, window_bounds = array<i64: 32, 40>}, {transform_indices = @transform_2, window_bounds = array<i64: 2, 1, 16>}, {pipeline_mode = #tpu.pipeline_mode<synchronous>, transform_indices = @transform_3, window_bounds = array<i64: 304, 64>}, {pipeline_mode = #tpu.pipeline_mode<synchronous>, transform_indices = @transform_4, window_bounds = array<i64: 80, 128>}, {transform_indices = @transform_5, window_bounds = array<i64: 16, 128>}]} {
    %c0 = arith.constant 0 : index
    %c0_0 = arith.constant 0 : index
    %0 = vector.load %arg4[%c0, %c0_0] : memref<304x64xf32, #tpu.memory_space<vmem>>, vector<40x64xf32>
    %c40 = arith.constant 40 : index
    %c0_1 = arith.constant 0 : index
    %1 = vector.load %arg4[%c40, %c0_1] : memref<304x64xf32, #tpu.memory_space<vmem>>, vector<64x64xf32>
    %c104 = arith.constant 104 : index
    %c0_2 = arith.constant 0 : index
    %2 = vector.load %arg4[%c104, %c0_2] : memref<304x64xf32, #tpu.memory_space<vmem>>, vector<64x64xf32>
    %c168 = arith.constant 168 : index
    %c0_3 = arith.constant 0 : index
    %3 = vector.load %arg4[%c168, %c0_3] : memref<304x64xf32, #tpu.memory_space<vmem>>, vector<1x64xf32>
    %c169 = arith.constant 169 : index
    %c0_4 = arith.constant 0 : index
    %4 = vector.load %arg4[%c169, %c0_4] : memref<304x64xf32, #tpu.memory_space<vmem>>, vector<1x64xf32>
    %c170 = arith.constant 170 : index
    %c0_5 = arith.constant 0 : index
    %5 = vector.load %arg4[%c170, %c0_5] : memref<304x64xf32, #tpu.memory_space<vmem>>, vector<1x64xf32>
    %c171 = arith.constant 171 : index
    %c0_6 = arith.constant 0 : index
    %6 = vector.load %arg4[%c171, %c0_6] : memref<304x64xf32, #tpu.memory_space<vmem>>, vector<1x64xf32>
    %c172 = arith.constant 172 : index
    %c0_7 = arith.constant 0 : index
    %7 = vector.load %arg4[%c172, %c0_7] : memref<304x64xf32, #tpu.memory_space<vmem>>, vector<1x64xf32>
    %c173 = arith.constant 173 : index
    %c0_8 = arith.constant 0 : index
    %8 = vector.load %arg4[%c173, %c0_8] : memref<304x64xf32, #tpu.memory_space<vmem>>, vector<1x64xf32>
    %c176 = arith.constant 176 : index
    %c0_9 = arith.constant 0 : index
    %9 = vector.load %arg4[%c176, %c0_9] : memref<304x64xf32, #tpu.memory_space<vmem>>, vector<128x64xf32>
    %c0_10 = arith.constant 0 : index
    %c0_11 = arith.constant 0 : index
    %10 = vector.load %arg5[%c0_10, %c0_11] : memref<80x128xf32, #tpu.memory_space<vmem>>, vector<40x128xf32>
    %c40_12 = arith.constant 40 : index
    %c0_13 = arith.constant 0 : index
    %11 = vector.load %arg5[%c40_12, %c0_13] : memref<80x128xf32, #tpu.memory_space<vmem>>, vector<32x128xf32>
    %c72 = arith.constant 72 : index
    %c0_14 = arith.constant 0 : index
    %12 = vector.load %arg5[%c72, %c0_14] : memref<80x128xf32, #tpu.memory_space<vmem>>, vector<1x128xf32>
    %c0_15 = arith.constant 0 : index
    %c0_16 = arith.constant 0 : index
    %13 = vector.load %arg1[%c0_15, %c0_16] : memref<16x40xf32, #tpu.memory_space<vmem>>, vector<16x40xf32>
    %cst = arith.constant dense<0.000000e+00> : vector<16x64xf32>
    %14 = tpu.matmul %13, %0, %cst {dimension_numbers = #tpu.dot_dimension_numbers<[1], [0], [0], [1], [0, 0, 1, 1], [], []>} : vector<16x40xf32>, vector<40x64xf32>, vector<16x64xf32> -> vector<16x64xf32>
    %c0_17 = arith.constant 0 : index
    %c0_18 = arith.constant 0 : index
    %15 = vector.load %arg2[%c0_17, %c0_18] : memref<32x40xf32, #tpu.memory_space<vmem>>, vector<32x40xf32>
    %cst_19 = arith.constant dense<0.000000e+00> : vector<32x128xf32>
    %16 = tpu.matmul %15, %10, %cst_19 {dimension_numbers = #tpu.dot_dimension_numbers<[1], [0], [0], [1], [0, 0, 1, 1], [], []>} : vector<32x40xf32>, vector<40x128xf32>, vector<32x128xf32> -> vector<32x128xf32>
    %17 = vector.extract_strided_slice %16 {offsets = [0, 0], sizes = [32, 64], strides = [1, 1]} : vector<32x128xf32> to vector<32x64xf32>
    %18 = vector.shape_cast %17 : vector<32x64xf32> to vector<2x16x64xf32>
    %19 = vector.extract_strided_slice %16 {offsets = [0, 64], sizes = [32, 64], strides = [1, 1]} : vector<32x128xf32> to vector<32x64xf32>
    %20 = vector.shape_cast %19 : vector<32x64xf32> to vector<2x16x64xf32>
    %21 = vector.shape_cast %14 : vector<16x64xf32> to vector<2x8x64xf32>
    %22 = tpu.concatenate %21, %21, %21, %21, %21, %21, %21, %21, %21, %21, %21, %21, %21, %21, %21, %21 in 1 : vector<2x8x64xf32>, vector<2x8x64xf32>, vector<2x8x64xf32>, vector<2x8x64xf32>, vector<2x8x64xf32>, vector<2x8x64xf32>, vector<2x8x64xf32>, vector<2x8x64xf32>, vector<2x8x64xf32>, vector<2x8x64xf32>, vector<2x8x64xf32>, vector<2x8x64xf32>, vector<2x8x64xf32>, vector<2x8x64xf32>, vector<2x8x64xf32>, vector<2x8x64xf32> -> vector<2x128x64xf32>
    %23 = vector.shape_cast %9 : vector<128x64xf32> to vector<1x128x64xf32>
    %24 = vector.broadcast %23 : vector<1x128x64xf32> to vector<2x128x64xf32>
    %25 = arith.mulf %22, %24 : vector<2x128x64xf32>
    "tpu.trace_start"() <{level = 10 : i32, message = "bre,bke->brk"}> : () -> ()
    %cst_20 = arith.constant dense<0.000000e+00> : vector<2x128x16xf32>
    %26 = tpu.matmul %25, %18, %cst_20 {dimension_numbers = #tpu.dot_dimension_numbers<[2], [2], [1], [1], [0, 0, 0, 1, 1, 1], [0], [0]>} : vector<2x128x64xf32>, vector<2x16x64xf32>, vector<2x128x16xf32> -> vector<2x128x16xf32>
    "tpu.trace_stop"() : () -> ()
    %cst_21 = arith.constant 5.000000e-01 : f32
    %27 = vector.broadcast %cst_21 : f32 to vector<2x128x16xf32>
    %28 = arith.mulf %26, %27 : vector<2x128x16xf32>
    %c0_22 = arith.constant 0 : index
    %c0_23 = arith.constant 0 : index
    %c0_24 = arith.constant 0 : index
    %29 = vector.load %arg3[%c0_22, %c0_23, %c0_24] : memref<2x1x16xf32, #tpu.memory_space<vmem>>, vector<2x1x16xf32>
    %30 = vector.broadcast %29 : vector<2x1x16xf32> to vector<2x128x16xf32>
    %31 = arith.addf %28, %30 : vector<2x128x16xf32>
    %cst_25 = arith.constant dense<0xFF800000> : vector<2x128xf32>
    %32 = vector.multi_reduction <maximumf>, %31, %cst_25 [2] : vector<2x128x16xf32> to vector<2x128xf32>
    %33 = vector.shape_cast %32 : vector<2x128xf32> to vector<2x128x1xf32>
    %34 = vector.broadcast %33 : vector<2x128x1xf32> to vector<2x128x16xf32>
    %35 = arith.subf %31, %34 : vector<2x128x16xf32>
    %36 = math.exp %35 : vector<2x128x16xf32>
    %cst_26 = arith.constant dense<0.000000e+00> : vector<2x128xf32>
    %37 = vector.multi_reduction <add>, %36, %cst_26 [2] : vector<2x128x16xf32> to vector<2x128xf32>
    %38 = vector.shape_cast %37 : vector<2x128xf32> to vector<2x128x1xf32>
    %39 = tpu.reciprocal %38 {approx = true} : vector<2x128x1xf32> -> vector<2x128x1xf32>
    %40 = vector.broadcast %39 : vector<2x128x1xf32> to vector<2x128x16xf32>
    %41 = arith.mulf %36, %40 : vector<2x128x16xf32>
    "tpu.trace_start"() <{level = 10 : i32, message = "brk,bke->bre"}> : () -> ()
    %cst_27 = arith.constant dense<0.000000e+00> : vector<2x128x64xf32>
    %42 = tpu.matmul %41, %20, %cst_27 {dimension_numbers = #tpu.dot_dimension_numbers<[2], [1], [1], [2], [0, 0, 0, 1, 1, 2], [0], [0]>} : vector<2x128x16xf32>, vector<2x16x64xf32>, vector<2x128x64xf32> -> vector<2x128x64xf32>
    "tpu.trace_stop"() : () -> ()
    %43 = vector.shape_cast %9 : vector<128x64xf32> to vector<1x128x64xf32>
    %44 = vector.broadcast %43 : vector<1x128x64xf32> to vector<2x128x64xf32>
    %45 = arith.mulf %42, %44 : vector<2x128x64xf32>
    %46 = vector.shape_cast %45 : vector<2x128x64xf32> to vector<2x16x8x64xf32>
    %cst_28 = arith.constant dense<0.000000e+00> : vector<2x8x64xf32>
    %47 = vector.multi_reduction <add>, %46, %cst_28 [1] : vector<2x16x8x64xf32> to vector<2x8x64xf32>
    %48 = vector.shape_cast %47 : vector<2x8x64xf32> to vector<16x64xf32>
    %cst_29 = arith.constant dense<0.000000e+00> : vector<16x64xf32>
    %49 = tpu.matmul %48, %1, %cst_29 {dimension_numbers = #tpu.dot_dimension_numbers<[1], [0], [0], [1], [0, 0, 1, 1], [], []>} : vector<16x64xf32>, vector<64x64xf32>, vector<16x64xf32> -> vector<16x64xf32>
    %50 = vector.broadcast %3 : vector<1x64xf32> to vector<16x64xf32>
    %51 = arith.addf %49, %50 : vector<16x64xf32>
    %cst_30 = arith.constant dense<0.000000e+00> : vector<16xf32>
    %52 = vector.multi_reduction <add>, %51, %cst_30 [1] : vector<16x64xf32> to vector<16xf32>
    %53 = vector.shape_cast %52 : vector<16xf32> to vector<16x1xf32>
    %cst_31 = arith.constant 6.400000e+01 : f32
    %54 = vector.broadcast %cst_31 : f32 to vector<16x1xf32>
    %55 = arith.divf %53, %54 : vector<16x1xf32>
    %56 = vector.broadcast %55 : vector<16x1xf32> to vector<16x64xf32>
    %57 = arith.subf %51, %56 : vector<16x64xf32>
    %58 = arith.mulf %57, %57 : vector<16x64xf32>
    %cst_32 = arith.constant dense<0.000000e+00> : vector<16xf32>
    %59 = vector.multi_reduction <add>, %58, %cst_32 [1] : vector<16x64xf32> to vector<16xf32>
    %60 = vector.shape_cast %59 : vector<16xf32> to vector<16x1xf32>
    %cst_33 = arith.constant 6.400000e+01 : f32
    %61 = vector.broadcast %cst_33 : f32 to vector<16x1xf32>
    %62 = arith.divf %60, %61 : vector<16x1xf32>
    %63 = vector.broadcast %55 : vector<16x1xf32> to vector<16x64xf32>
    %64 = arith.subf %51, %63 : vector<16x64xf32>
    %cst_34 = arith.constant 9.99999974E-6 : f32
    %65 = vector.broadcast %cst_34 : f32 to vector<16x1xf32>
    %66 = arith.addf %62, %65 : vector<16x1xf32>
    %67 = math.rsqrt %66 : vector<16x1xf32>
    %68 = vector.broadcast %67 : vector<16x1xf32> to vector<16x64xf32>
    %69 = arith.mulf %64, %68 : vector<16x64xf32>
    %70 = vector.broadcast %4 : vector<1x64xf32> to vector<16x64xf32>
    %71 = arith.mulf %69, %70 : vector<16x64xf32>
    %72 = vector.broadcast %5 : vector<1x64xf32> to vector<16x64xf32>
    %73 = arith.addf %71, %72 : vector<16x64xf32>
    %cst_35 = arith.constant 0.000000e+00 : f32
    %74 = vector.broadcast %cst_35 : f32 to vector<16x64xf32>
    %75 = arith.maximumf %73, %74 : vector<16x64xf32>
    %cst_36 = arith.constant dense<0.000000e+00> : vector<16x64xf32>
    %76 = tpu.matmul %75, %2, %cst_36 {dimension_numbers = #tpu.dot_dimension_numbers<[1], [0], [0], [1], [0, 0, 1, 1], [], []>} : vector<16x64xf32>, vector<64x64xf32>, vector<16x64xf32> -> vector<16x64xf32>
    %77 = vector.extract_strided_slice %76 {offsets = [0, 0], sizes = [16, 32], strides = [1, 1]} : vector<16x64xf32> to vector<16x32xf32>
    %78 = vector.extract_strided_slice %6 {offsets = [0, 0], sizes = [1, 32], strides = [1, 1]} : vector<1x64xf32> to vector<1x32xf32>
    %79 = vector.broadcast %78 : vector<1x32xf32> to vector<16x32xf32>
    %80 = arith.addf %77, %79 : vector<16x32xf32>
    %81 = vector.extract_strided_slice %7 {offsets = [0, 0], sizes = [1, 32], strides = [1, 1]} : vector<1x64xf32> to vector<1x32xf32>
    %82 = vector.extract_strided_slice %8 {offsets = [0, 0], sizes = [1, 32], strides = [1, 1]} : vector<1x64xf32> to vector<1x32xf32>
    %cst_37 = arith.constant dense<0.000000e+00> : vector<16xf32>
    %83 = vector.multi_reduction <add>, %80, %cst_37 [1] : vector<16x32xf32> to vector<16xf32>
    %84 = vector.shape_cast %83 : vector<16xf32> to vector<16x1xf32>
    %cst_38 = arith.constant 3.200000e+01 : f32
    %85 = vector.broadcast %cst_38 : f32 to vector<16x1xf32>
    %86 = arith.divf %84, %85 : vector<16x1xf32>
    %87 = vector.broadcast %86 : vector<16x1xf32> to vector<16x32xf32>
    %88 = arith.subf %80, %87 : vector<16x32xf32>
    %89 = arith.mulf %88, %88 : vector<16x32xf32>
    %cst_39 = arith.constant dense<0.000000e+00> : vector<16xf32>
    %90 = vector.multi_reduction <add>, %89, %cst_39 [1] : vector<16x32xf32> to vector<16xf32>
    %91 = vector.shape_cast %90 : vector<16xf32> to vector<16x1xf32>
    %cst_40 = arith.constant 3.200000e+01 : f32
    %92 = vector.broadcast %cst_40 : f32 to vector<16x1xf32>
    %93 = arith.divf %91, %92 : vector<16x1xf32>
    %94 = vector.broadcast %86 : vector<16x1xf32> to vector<16x32xf32>
    %95 = arith.subf %80, %94 : vector<16x32xf32>
    %cst_41 = arith.constant 9.99999974E-6 : f32
    %96 = vector.broadcast %cst_41 : f32 to vector<16x1xf32>
    %97 = arith.addf %93, %96 : vector<16x1xf32>
    %98 = math.rsqrt %97 : vector<16x1xf32>
    %99 = vector.broadcast %98 : vector<16x1xf32> to vector<16x32xf32>
    %100 = arith.mulf %95, %99 : vector<16x32xf32>
    %101 = vector.broadcast %81 : vector<1x32xf32> to vector<16x32xf32>
    %102 = arith.mulf %100, %101 : vector<16x32xf32>
    %103 = vector.broadcast %82 : vector<1x32xf32> to vector<16x32xf32>
    %104 = arith.addf %102, %103 : vector<16x32xf32>
    %cst_42 = arith.constant 0.000000e+00 : f32
    %105 = vector.broadcast %cst_42 : f32 to vector<16x32xf32>
    %106 = arith.maximumf %104, %105 : vector<16x32xf32>
    %cst_43 = arith.constant dense<0.000000e+00> : vector<16x128xf32>
    %107 = tpu.matmul %106, %11, %cst_43 {dimension_numbers = #tpu.dot_dimension_numbers<[1], [0], [0], [1], [0, 0, 1, 1], [], []>} : vector<16x32xf32>, vector<32x128xf32>, vector<16x128xf32> -> vector<16x128xf32>
    %108 = vector.broadcast %12 : vector<1x128xf32> to vector<16x128xf32>
    %109 = arith.addf %107, %108 : vector<16x128xf32>
    %110 = tpu.iota {dimensions = array<i32: 1>} : vector<16x128xi32>
    %c3_i32 = arith.constant 3 : i32
    %111 = vector.broadcast %c3_i32 : i32 to vector<16x128xi32>
    %112 = arith.cmpi sge, %110, %111 : vector<16x128xi32>
    %cst_44 = arith.constant 0.000000e+00 : f32
    %113 = vector.broadcast %cst_44 : f32 to vector<16x128xf32>
    %114 = arith.maximumf %109, %113 : vector<16x128xf32>
    %115 = vector.broadcast %cst_44 : f32 to vector<16x128xf32>
    %116 = arith.subf %109, %115 : vector<16x128xf32>
    %117 = arith.cmpf one, %116, %116 : vector<16x128xf32>
    %118 = vector.broadcast %cst_44 : f32 to vector<16x128xf32>
    %119 = arith.addf %109, %118 : vector<16x128xf32>
    %120 = math.absf %116 : vector<16x128xf32>
    %cst_45 = arith.constant 0.000000e+00 : f32
    %121 = vector.broadcast %cst_45 : f32 to vector<16x128xf32>
    %122 = arith.subf %121, %120 : vector<16x128xf32>
    %123 = math.exp %122 : vector<16x128xf32>
    %124 = math.log1p %123 : vector<16x128xf32>
    %125 = arith.addf %114, %124 : vector<16x128xf32>
    %126 = arith.select %117, %119, %125 : vector<16x128xi1>, vector<16x128xf32>
    %127 = arith.select %112, %126, %109 : vector<16x128xi1>, vector<16x128xf32>
    %c0_46 = arith.constant 0 : index
    %c0_47 = arith.constant 0 : index
    %128 = vector.load %arg6[%c0_46, %c0_47] : memref<16x128xf32, #tpu.memory_space<vmem>>, vector<16x128xf32>
    tpu.vector_store %arg6[%c0_46, %c0_47], %127 {strides = array<i32>} : memref<16x128xf32, #tpu.memory_space<vmem>>, vector<16x128xf32>,
    return
  }
  func.func @transform_0(%arg0: i32) -> (i32, i32) {
    %c0_i32 = arith.constant 0 : i32
    %c0_i32_0 = arith.constant 0 : i32
    return %arg0, %c0_i32 : i32, i32
  }
  func.func @transform_1(%arg0: i32) -> (i32, i32) {
    %c0_i32 = arith.constant 0 : i32
    %c0_i32_0 = arith.constant 0 : i32
    return %arg0, %c0_i32 : i32, i32
  }
  func.func @transform_2(%arg0: i32) -> (i32, i32, i32) {
    %c0_i32 = arith.constant 0 : i32
    %c0_i32_0 = arith.constant 0 : i32
    %c0_i32_1 = arith.constant 0 : i32
    return %arg0, %c0_i32, %c0_i32_0 : i32, i32, i32
  }
  func.func @transform_3(%arg0: i32) -> (i32, i32) {
    %c0_i32 = arith.constant 0 : i32
    %c0_i32_0 = arith.constant 0 : i32
    %c0_i32_1 = arith.constant 0 : i32
    return %c0_i32, %c0_i32_0 : i32, i32
  }
  func.func @transform_4(%arg0: i32) -> (i32, i32) {
    %c0_i32 = arith.constant 0 : i32
    %c0_i32_0 = arith.constant 0 : i32
    %c0_i32_1 = arith.constant 0 : i32
    return %c0_i32, %c0_i32_0 : i32, i32
  }
  func.func @transform_5(%arg0: i32) -> (i32, i32) {
    %c0_i32 = arith.constant 0 : i32
    %c0_i32_0 = arith.constant 0 : i32
    return %arg0, %c0_i32 : i32, i32
  }
}

</mosaic_0001>

<llo_original>
// kernel: tpu_custom_call.1
$region0: #{tpu_custom_call.1}
  #allocation0 [shape = 'u32[]', space=smem, size = 0x4, offset = 0x4, fixed_abs, tag = 'smem constant byte address 0x4 - core index']
  #allocation1 [shape = 'u32[72,128]{1,0:T(1,128)}', space=vmem, size = 0x9000, scoped, tag = 'internal scratch']
  %s0 = inlined_call_operand.vmem [shape: f32[16,40], index: 0, kind: input, shape index: {}]
  %s1 = inlined_call_operand.vmem [shape: f32[32,40], index: 1, kind: input, shape index: {}]
  %s2 = inlined_call_operand.vmem [shape: f32[2,1,16], index: 2, kind: input, shape index: {}]
  %s3 = inlined_call_operand.vmem [shape: f32[304,64], index: 3, kind: input, shape index: {}]
  %s4 = inlined_call_operand.vmem [shape: f32[80,128], index: 4, kind: input, shape index: {}]
  %s5 = inlined_call_operand.hbm [shape: f32[16,128], index: 5, kind: output, shape index: {}]
  %s6 = sld [smem:[#allocation0]]
  $region30: #{tpu_custom_call.1} parent=0
    _
  %s8 = ssub.s32 1, %s6
  %s9 = scalar_select 0, %s8, %s6
  $region1: #{tpu_custom_call.1} parent=0
    #allocation2 [shape = 'u8[8192]{0}', space=vmem, size = 0x2000, scoped, tag = 'output window, operand 0, single buffered']
    #allocation3 [shape = 's32[1]{0}', space=sflag, size = 0x4, scoped, tag = 'scoped memory for tpu_custom_call.1']
    %10 = vsyncpa [#allocation3], 0
    // Predicated region
    $region2: #{tpu_custom_call.1} parent=1 // pred_check
      _
    $region3: #{tpu_custom_call.1} parent=1 // pred_check_branch
      %12 = sbr.rel (0) target = $region5
    $region4: #{tpu_custom_call.1} parent=1 // pred_region
      _
    $region5: #{tpu_custom_call.1} parent=1 // pred_fallthru
      _
    // Predicated region
    $region6: #{tpu_custom_call.1} parent=1 // pred_check
      _
    $region7: #{tpu_custom_call.1} parent=1 // pred_check_branch
      %14 = sbr.rel (0) target = $region9
    $region8: #{tpu_custom_call.1} parent=1 // pred_region
      _
    $region9: #{tpu_custom_call.1} parent=1 // pred_fallthru
      _
    // Predicated region
    $region10: #{tpu_custom_call.1} parent=1 // pred_check
      _
    $region11: #{tpu_custom_call.1} parent=1 // pred_check_branch
      %16 = sbr.rel (0) target = $region13
    $region12: #{tpu_custom_call.1} parent=1 // pred_region
      _
    $region13: #{tpu_custom_call.1} parent=1 // pred_fallthru
      _
    // Predicated region
    $region14: #{tpu_custom_call.1} parent=1 // pred_check
      _
    $region15: #{tpu_custom_call.1} parent=1 // pred_check_branch
      %18 = sbr.rel (0) target = $region17
    $region16: #{tpu_custom_call.1} parent=1 // pred_region
      _
    $region17: #{tpu_custom_call.1} parent=1 // pred_fallthru
      _
    // Predicated region
    $region18: #{tpu_custom_call.1} parent=1 // pred_check
      _
    $region19: #{tpu_custom_call.1} parent=1 // pred_check_branch
      %20 = sbr.rel (0) target = $region21
    $region20: #{tpu_custom_call.1} parent=1 // pred_region
      _
    $region21: #{tpu_custom_call.1} parent=1 // pred_fallthru
      _
    %v21 = vld [vmem:[%s3] sm:$0xff]
    %v22 = vld [vmem:[%s3 + $0x8] sm:$0xff]
    %v23 = vld [vmem:[%s3 + $0x10] sm:$0xff]
    %v24 = vld [vmem:[%s3 + $0x18] sm:$0xff]
    %v25 = vld [vmem:[%s3 + $0x20] sm:$0xff]
    %v26 = vld [vmem:[%s3 + $0x28] sm:$0xff]
    %v27 = vld [vmem:[%s3 + $0x30] sm:$0xff]
    %v28 = vld [vmem:[%s3 + $0x38] sm:$0xff]
    %v29 = vld [vmem:[%s3 + $0x40] sm:$0xff]
    %v30 = vld [vmem:[%s3 + $0x48] sm:$0xff]
    %v31 = vld [vmem:[%s3 + $0x50] sm:$0xff]
    %v32 = vld [vmem:[%s3 + $0x58] sm:$0xff]
    %v33 = vld [vmem:[%s3 + $0x60] sm:$0xff]
    %v34 = vld [vmem:[%s3 + $0x68] sm:$0xff]
    %v35 = vld [vmem:[%s3 + $0x70] sm:$0xff]
    %v36 = vld [vmem:[%s3 + $0x78] sm:$0xff]
    %v37 = vld [vmem:[%s3 + $0x80] sm:$0xff]
    %v38 = vld [vmem:[%s3 + $0x88] sm:$0xff]
    %v39 = vld [vmem:[%s3 + $0x90] sm:$0xff]
    %v40 = vld [vmem:[%s3 + $0x98] sm:$0xff]
    %v41 = vld [vmem:[%s3 + $0xa0] sm:$0xff]
    %v42 = vld [vmem:[%s3 + $0xa8] sm:$0x1]
    %v43 = vld [vmem:[%s3 + $0xa9] sm:$0x1]
    %v44 = vld [vmem:[%s3 + $0xaa] sm:$0x1]
    %v45 = vld [vmem:[%s3 + $0xab] sm:$0x1]
    %v46 = vld [vmem:[%s3 + $0xac] sm:$0x1]
    %v47 = vld [vmem:[%s3 + $0xad] sm:$0x1]
    %v48 = vld [vmem:[%s3 + $0xb0] sm:$0xff]
    %v49 = vld [vmem:[%s3 + $0xb8] sm:$0xff]
    %v50 = vld [vmem:[%s3 + $0xc0] sm:$0xff]
    %v51 = vld [vmem:[%s3 + $0xc8] sm:$0xff]
    %v52 = vld [vmem:[%s3 + $0xd0] sm:$0xff]
    %v53 = vld [vmem:[%s3 + $0xd8] sm:$0xff]
    %v54 = vld [vmem:[%s3 + $0xe0] sm:$0xff]
    %v55 = vld [vmem:[%s3 + $0xe8] sm:$0xff]
    %v56 = vld [vmem:[%s3 + $0xf0] sm:$0xff]
    %v57 = vld [vmem:[%s3 + $0xf8] sm:$0xff]
    %v58 = vld [vmem:[%s3 + $0x100] sm:$0xff]
    %v59 = vld [vmem:[%s3 + $0x108] sm:$0xff]
    %v60 = vld [vmem:[%s3 + $0x110] sm:$0xff]
    %v61 = vld [vmem:[%s3 + $0x118] sm:$0xff]
    %v62 = vld [vmem:[%s3 + $0x120] sm:$0xff]
    %v63 = vld [vmem:[%s3 + $0x128] sm:$0xff]
    %v64 = vld [vmem:[%s4] sm:$0xff]
    %v65 = vld [vmem:[%s4 + $0x8] sm:$0xff]
    %v66 = vld [vmem:[%s4 + $0x10] sm:$0xff]
    %v67 = vld [vmem:[%s4 + $0x18] sm:$0xff]
    %v68 = vld [vmem:[%s4 + $0x20] sm:$0xff]
    %v69 = vld [vmem:[%s4 + $0x28] sm:$0xff]
    %v70 = vld [vmem:[%s4 + $0x30] sm:$0xff]
    %v71 = vld [vmem:[%s4 + $0x38] sm:$0xff]
    %v72 = vld [vmem:[%s4 + $0x40] sm:$0xff]
    %v73 = vld [vmem:[%s4 + $0x48] sm:$0x1]
    %v74 = vld [vmem:[%s0] sm:$0xff]
    %v75 = vld [vmem:[%s0 + $0x8] sm:$0xff]
    %vm76 = vcmask 326656
    %v78 = vsel %vm76, %v74, 0
    %v81 = vsel %vm76, %v75, 0
    %83 = vmatpush.msra.mxu0 0.0
    %84 = vmatpush.msra.mxu0 0.0
    %85 = vmatpush.msra.mxu0 0.0
    %86 = vmatpush.msra.mxu0 0.0
    %87 = vmatpush.msra.mxu0 0.0
    %88 = vmatpush.msra.mxu0 0.0
    %89 = vmatpush.msra.mxu0 0.0
    %90 = vmatpush.msra.mxu0 0.0
    %91 = vmatpush.msra.mxu0 0.0
    %92 = vmatpush.msra.mxu0 0.0
    %93 = vmatpush.msra.mxu0 0.0
    %94 = vmatpush.msra.mxu0 %v25
    %95 = vmatpush.msra.mxu0 %v24
    %96 = vmatpush.msra.mxu0 %v23
    %97 = vmatpush.msra.mxu0 %v22
    %98 = vmatpush.msra.mxu0 %v21
    %99 = vmatmul.f32.gmra.mxu0 %v78
    %v100 = vpop.f32.mrf.mxu0
    %v101 = vadd.f32 0.0, %v100
    %102 = vmatmul.f32.gmra.mxu0 %v81
    %v103 = vpop.f32.mrf.mxu0
    %v104 = vadd.f32 0.0, %v103
    %105 = vdwg.mxu0
    %v106 = vld [vmem:[%s1] sm:$0xff]
    %v107 = vld [vmem:[%s1 + $0x8] sm:$0xff]
    %v108 = vld [vmem:[%s1 + $0x10] sm:$0xff]
    %v109 = vld [vmem:[%s1 + $0x18] sm:$0xff]
    %v111 = vsel %vm76, %v106, 0
    %v114 = vsel %vm76, %v107, 0
    %v117 = vsel %vm76, %v108, 0
    %v120 = vsel %vm76, %v109, 0
    %122 = vmatpush.msra.mxu0 0.0
    %123 = vmatpush.msra.mxu0 0.0
    %124 = vmatpush.msra.mxu0 0.0
    %125 = vmatpush.msra.mxu0 0.0
    %126 = vmatpush.msra.mxu0 0.0
    %127 = vmatpush.msra.mxu0 0.0
    %128 = vmatpush.msra.mxu0 0.0
    %129 = vmatpush.msra.mxu0 0.0
    %130 = vmatpush.msra.mxu0 0.0
    %131 = vmatpush.msra.mxu0 0.0
    %132 = vmatpush.msra.mxu0 0.0
    %133 = vmatpush.msra.mxu0 %v68
    %134 = vmatpush.msra.mxu0 %v67
    %135 = vmatpush.msra.mxu0 %v66
    %136 = vmatpush.msra.mxu0 %v65
    %137 = vmatpush.msra.mxu0 %v64
    %138 = vmatmul.f32.gmra.mxu0 %v111
    %v139 = vpop.f32.mrf.mxu0
    %v140 = vadd.f32 0.0, %v139
    %141 = vmatmul.f32.gmra.mxu0 %v114
    %v142 = vpop.f32.mrf.mxu0
    %v143 = vadd.f32 0.0, %v142
    %144 = vmatmul.f32.gmra.mxu0 %v117
    %v145 = vpop.f32.mrf.mxu0
    %v146 = vadd.f32 0.0, %v145
    %147 = vmatmul.f32.gmra.mxu0 %v120
    %v148 = vpop.f32.mrf.mxu0
    %v149 = vadd.f32 0.0, %v148
    %150 = vdwg.mxu0
    %v151 = vmul.f32 %v101, %v48
    %v152 = vmul.f32 %v101, %v49
    %v153 = vmul.f32 %v101, %v50
    %v154 = vmul.f32 %v101, %v51
    %v155 = vmul.f32 %v101, %v52
    %v156 = vmul.f32 %v101, %v53
    %v157 = vmul.f32 %v101, %v54
    %v158 = vmul.f32 %v101, %v55
    %v159 = vmul.f32 %v101, %v56
    %v160 = vmul.f32 %v101, %v57
    %v161 = vmul.f32 %v101, %v58
    %v162 = vmul.f32 %v101, %v59
    %v163 = vmul.f32 %v101, %v60
    %v164 = vmul.f32 %v101, %v61
    %v165 = vmul.f32 %v101, %v62
    %v166 = vmul.f32 %v101, %v63
    %v167 = vmul.f32 %v104, %v48
    %v168 = vmul.f32 %v104, %v49
    %v169 = vmul.f32 %v104, %v50
    %v170 = vmul.f32 %v104, %v51
    %v171 = vmul.f32 %v104, %v52
    %v172 = vmul.f32 %v104, %v53
    %v173 = vmul.f32 %v104, %v54
    %v174 = vmul.f32 %v104, %v55
    %v175 = vmul.f32 %v104, %v56
    %v176 = vmul.f32 %v104, %v57
    %v177 = vmul.f32 %v104, %v58
    %v178 = vmul.f32 %v104, %v59
    %v179 = vmul.f32 %v104, %v60
    %v180 = vmul.f32 %v104, %v61
    %v181 = vmul.f32 %v104, %v62
    %v182 = vmul.f32 %v104, %v63
    %vm183 = vcmask 523264
    %v185 = vsel %vm183, %v151, 0
    %v188 = vsel %vm183, %v152, 0
    %v191 = vsel %vm183, %v153, 0
    %v194 = vsel %vm183, %v154, 0
    %v197 = vsel %vm183, %v155, 0
    %v200 = vsel %vm183, %v156, 0
    %v203 = vsel %vm183, %v157, 0
    %v206 = vsel %vm183, %v158, 0
    %v209 = vsel %vm183, %v159, 0
    %v212 = vsel %vm183, %v160, 0
    %v215 = vsel %vm183, %v161, 0
    %v218 = vsel %vm183, %v162, 0
    %v221 = vsel %vm183, %v163, 0
    %v224 = vsel %vm183, %v164, 0
    %v227 = vsel %vm183, %v165, 0
    %v230 = vsel %vm183, %v166, 0
    %v233 = vsel %vm183, %v140, 0
    %v236 = vsel %vm183, %v143, 0
    %238 = vmatpush.xpose.msra.mxu0 0.0
    %239 = vmatpush.xpose.msra.mxu0 0.0
    %240 = vmatpush.xpose.msra.mxu0 0.0
    %241 = vmatpush.xpose.msra.mxu0 0.0
    %242 = vmatpush.xpose.msra.mxu0 0.0
    %243 = vmatpush.xpose.msra.mxu0 0.0
    %244 = vmatpush.xpose.msra.mxu0 0.0
    %245 = vmatpush.xpose.msra.mxu0 0.0
    %246 = vmatpush.xpose.msra.mxu0 0.0
    %247 = vmatpush.xpose.msra.mxu0 0.0
    %248 = vmatpush.xpose.msra.mxu0 0.0
    %249 = vmatpush.xpose.msra.mxu0 0.0
    %250 = vmatpush.xpose.msra.mxu0 0.0
    %251 = vmatpush.xpose.msra.mxu0 0.0
    %252 = vmatpush.xpose.msra.mxu0 %v236
    %253 = vmatpush.xpose.msra.mxu0 %v233
    %254 = vmatmul.f32.gmra.mxu0 %v185
    %v255 = vpop.f32.mrf.mxu0
    %v256 = vadd.f32 0.0, %v255
    %257 = vmatmul.f32.gmra.mxu0 %v188
    %v258 = vpop.f32.mrf.mxu0
    %v259 = vadd.f32 0.0, %v258
    %260 = vmatmul.f32.gmra.mxu0 %v191
    %v261 = vpop.f32.mrf.mxu0
    %v262 = vadd.f32 0.0, %v261
    %263 = vmatmul.f32.gmra.mxu0 %v194
    %v264 = vpop.f32.mrf.mxu0
    %v265 = vadd.f32 0.0, %v264
    %266 = vmatmul.f32.gmra.mxu0 %v197
    %v267 = vpop.f32.mrf.mxu0
    %v268 = vadd.f32 0.0, %v267
    %269 = vmatmul.f32.gmra.mxu0 %v200
    %v270 = vpop.f32.mrf.mxu0
    %v271 = vadd.f32 0.0, %v270
    %272 = vmatmul.f32.gmra.mxu0 %v203
    %v273 = vpop.f32.mrf.mxu0
    %v274 = vadd.f32 0.0, %v273
    %275 = vmatmul.f32.gmra.mxu0 %v206
    %v276 = vpop.f32.mrf.mxu0
    %v277 = vadd.f32 0.0, %v276
    %278 = vmatmul.f32.gmra.mxu0 %v209
    %v279 = vpop.f32.mrf.mxu0
    %v280 = vadd.f32 0.0, %v279
    %281 = vmatmul.f32.gmra.mxu0 %v212
    %v282 = vpop.f32.mrf.mxu0
    %v283 = vadd.f32 0.0, %v282
    %284 = vmatmul.f32.gmra.mxu0 %v215
    %v285 = vpop.f32.mrf.mxu0
    %v286 = vadd.f32 0.0, %v285
    %287 = vmatmul.f32.gmra.mxu0 %v218
    %v288 = vpop.f32.mrf.mxu0
    %v289 = vadd.f32 0.0, %v288
    %290 = vmatmul.f32.gmra.mxu0 %v221
    %v291 = vpop.f32.mrf.mxu0
    %v292 = vadd.f32 0.0, %v291
    %293 = vmatmul.f32.gmra.mxu0 %v224
    %v294 = vpop.f32.mrf.mxu0
    %v295 = vadd.f32 0.0, %v294
    %296 = vmatmul.f32.gmra.mxu0 %v227
    %v297 = vpop.f32.mrf.mxu0
    %v298 = vadd.f32 0.0, %v297
    %299 = vmatmul.f32.gmra.mxu0 %v230
    %v300 = vpop.f32.mrf.mxu0
    %v301 = vadd.f32 0.0, %v300
    %302 = vdwg.mxu0
    %v304 = vsel %vm183, %v167, 0
    %v307 = vsel %vm183, %v168, 0
    %v310 = vsel %vm183, %v169, 0
    %v313 = vsel %vm183, %v170, 0
    %v316 = vsel %vm183, %v171, 0
    %v319 = vsel %vm183, %v172, 0
    %v322 = vsel %vm183, %v173, 0
    %v325 = vsel %vm183, %v174, 0
    %v328 = vsel %vm183, %v175, 0
    %v331 = vsel %vm183, %v176, 0
    %v334 = vsel %vm183, %v177, 0
    %v337 = vsel %vm183, %v178, 0
    %v340 = vsel %vm183, %v179, 0
    %v343 = vsel %vm183, %v180, 0
    %v346 = vsel %vm183, %v181, 0
    %v349 = vsel %vm183, %v182, 0
    %v352 = vsel %vm183, %v146, 0
    %v355 = vsel %vm183, %v149, 0
    %357 = vmatpush.xpose.msra.mxu0 0.0
    %358 = vmatpush.xpose.msra.mxu0 0.0
    %359 = vmatpush.xpose.msra.mxu0 0.0
    %360 = vmatpush.xpose.msra.mxu0 0.0
    %361 = vmatpush.xpose.msra.mxu0 0.0
    %362 = vmatpush.xpose.msra.mxu0 0.0
    %363 = vmatpush.xpose.msra.mxu0 0.0
    %364 = vmatpush.xpose.msra.mxu0 0.0
    %365 = vmatpush.xpose.msra.mxu0 0.0
    %366 = vmatpush.xpose.msra.mxu0 0.0
    %367 = vmatpush.xpose.msra.mxu0 0.0
    %368 = vmatpush.xpose.msra.mxu0 0.0
    %369 = vmatpush.xpose.msra.mxu0 0.0
    %370 = vmatpush.xpose.msra.mxu0 0.0
    %371 = vmatpush.xpose.msra.mxu0 %v355
    %372 = vmatpush.xpose.msra.mxu0 %v352
    %373 = vmatmul.f32.gmra.mxu0 %v304
    %v374 = vpop.f32.mrf.mxu0
    %v375 = vadd.f32 0.0, %v374
    %376 = vmatmul.f32.gmra.mxu0 %v307
    %v377 = vpop.f32.mrf.mxu0
    %v378 = vadd.f32 0.0, %v377
    %379 = vmatmul.f32.gmra.mxu0 %v310
    %v380 = vpop.f32.mrf.mxu0
    %v381 = vadd.f32 0.0, %v380
    %382 = vmatmul.f32.gmra.mxu0 %v313
    %v383 = vpop.f32.mrf.mxu0
    %v384 = vadd.f32 0.0, %v383
    %385 = vmatmul.f32.gmra.mxu0 %v316
    %v386 = vpop.f32.mrf.mxu0
    %v387 = vadd.f32 0.0, %v386
    %388 = vmatmul.f32.gmra.mxu0 %v319
    %v389 = vpop.f32.mrf.mxu0
    %v390 = vadd.f32 0.0, %v389
    %391 = vmatmul.f32.gmra.mxu0 %v322
    %v392 = vpop.f32.mrf.mxu0
    %v393 = vadd.f32 0.0, %v392
    %394 = vmatmul.f32.gmra.mxu0 %v325
    %v395 = vpop.f32.mrf.mxu0
    %v396 = vadd.f32 0.0, %v395
    %397 = vmatmul.f32.gmra.mxu0 %v328
    %v398 = vpop.f32.mrf.mxu0
    %v399 = vadd.f32 0.0, %v398
    %400 = vmatmul.f32.gmra.mxu0 %v331
    %v401 = vpop.f32.mrf.mxu0
    %v402 = vadd.f32 0.0, %v401
    %403 = vmatmul.f32.gmra.mxu0 %v334
    %v404 = vpop.f32.mrf.mxu0
    %v405 = vadd.f32 0.0, %v404
    %406 = vmatmul.f32.gmra.mxu0 %v337
    %v407 = vpop.f32.mrf.mxu0
    %v408 = vadd.f32 0.0, %v407
    %409 = vmatmul.f32.gmra.mxu0 %v340
    %v410 = vpop.f32.mrf.mxu0
    %v411 = vadd.f32 0.0, %v410
    %412 = vmatmul.f32.gmra.mxu0 %v343
    %v413 = vpop.f32.mrf.mxu0
    %v414 = vadd.f32 0.0, %v413
    %415 = vmatmul.f32.gmra.mxu0 %v346
    %v416 = vpop.f32.mrf.mxu0
    %v417 = vadd.f32 0.0, %v416
    %418 = vmatmul.f32.gmra.mxu0 %v349
    %v419 = vpop.f32.mrf.mxu0
    %v420 = vadd.f32 0.0, %v419
    %421 = vdwg.mxu0
    %v422 = vmul.f32 %v256, 0.5
    %v423 = vmul.f32 %v259, 0.5
    %v424 = vmul.f32 %v262, 0.5
    %v425 = vmul.f32 %v265, 0.5
    %v426 = vmul.f32 %v268, 0.5
    %v427 = vmul.f32 %v271, 0.5
    %v428 = vmul.f32 %v274, 0.5
    %v429 = vmul.f32 %v277, 0.5
    %v430 = vmul.f32 %v280, 0.5
    %v431 = vmul.f32 %v283, 0.5
    %v432 = vmul.f32 %v286, 0.5
    %v433 = vmul.f32 %v289, 0.5
    %v434 = vmul.f32 %v292, 0.5
    %v435 = vmul.f32 %v295, 0.5
    %v436 = vmul.f32 %v298, 0.5
    %v437 = vmul.f32 %v301, 0.5
    %v438 = vmul.f32 %v375, 0.5
    %v439 = vmul.f32 %v378, 0.5
    %v440 = vmul.f32 %v381, 0.5
    %v441 = vmul.f32 %v384, 0.5
    %v442 = vmul.f32 %v387, 0.5
    %v443 = vmul.f32 %v390, 0.5
    %v444 = vmul.f32 %v393, 0.5
    %v445 = vmul.f32 %v396, 0.5
    %v446 = vmul.f32 %v399, 0.5
    %v447 = vmul.f32 %v402, 0.5
    %v448 = vmul.f32 %v405, 0.5
    %v449 = vmul.f32 %v408, 0.5
    %v450 = vmul.f32 %v411, 0.5
    %v451 = vmul.f32 %v414, 0.5
    %v452 = vmul.f32 %v417, 0.5
    %v453 = vmul.f32 %v420, 0.5
    %v454 = vld [vmem:[%s2] sm:$0x1]
    %v455 = vld [vmem:[%s2 + $0x1] sm:$0x1]
    %v458 = vperm.slane %v454, 0
    %v459 = vperm.slane %v455, 0
    %v462 = vadd.f32 %v422, %v458
    %v463 = vadd.f32 %v423, %v458
    %v464 = vadd.f32 %v424, %v458
    %v465 = vadd.f32 %v425, %v458
    %v466 = vadd.f32 %v426, %v458
    %v467 = vadd.f32 %v427, %v458
    %v468 = vadd.f32 %v428, %v458
    %v469 = vadd.f32 %v429, %v458
    %v470 = vadd.f32 %v430, %v458
    %v471 = vadd.f32 %v431, %v458
    %v472 = vadd.f32 %v432, %v458
    %v473 = vadd.f32 %v433, %v458
    %v474 = vadd.f32 %v434, %v458
    %v475 = vadd.f32 %v435, %v458
    %v476 = vadd.f32 %v436, %v458
    %v477 = vadd.f32 %v437, %v458
    %v478 = vadd.f32 %v438, %v459
    %v479 = vadd.f32 %v439, %v459
    %v480 = vadd.f32 %v440, %v459
    %v481 = vadd.f32 %v441, %v459
    %v482 = vadd.f32 %v442, %v459
    %v483 = vadd.f32 %v443, %v459
    %v484 = vadd.f32 %v444, %v459
    %v485 = vadd.f32 %v445, %v459
    %v486 = vadd.f32 %v446, %v459
    %v487 = vadd.f32 %v447, %v459
    %v488 = vadd.f32 %v448, %v459
    %v489 = vadd.f32 %v449, %v459
    %v490 = vadd.f32 %v450, %v459
    %v491 = vadd.f32 %v451, %v459
    %v492 = vadd.f32 %v452, %v459
    %v493 = vadd.f32 %v453, %v459
    %vm494 = vcmask 130048
    %v495 = vsel %vm494, %v462, -inf
    %496 = vmax.xlane.f32.xlu0 %v495
    %v497 = vpop.xlane.xlu0 %496
    %v498 = vsel %vm494, %v463, -inf
    %499 = vmax.xlane.f32.xlu0 %v498
    %v500 = vpop.xlane.xlu0 %499
    %v501 = vsel %vm494, %v464, -inf
    %502 = vmax.xlane.f32.xlu0 %v501
    %v503 = vpop.xlane.xlu0 %502
    %v504 = vsel %vm494, %v465, -inf
    %505 = vmax.xlane.f32.xlu0 %v504
    %v506 = vpop.xlane.xlu0 %505
    %v507 = vsel %vm494, %v466, -inf
    %508 = vmax.xlane.f32.xlu0 %v507
    %v509 = vpop.xlane.xlu0 %508
    %v510 = vsel %vm494, %v467, -inf
    %511 = vmax.xlane.f32.xlu0 %v510
    %v512 = vpop.xlane.xlu0 %511
    %v513 = vsel %vm494, %v468, -inf
    %514 = vmax.xlane.f32.xlu0 %v513
    %v515 = vpop.xlane.xlu0 %514
    %v516 = vsel %vm494, %v469, -inf
    %517 = vmax.xlane.f32.xlu0 %v516
    %v518 = vpop.xlane.xlu0 %517
    %v519 = vsel %vm494, %v470, -inf
    %520 = vmax.xlane.f32.xlu0 %v519
    %v521 = vpop.xlane.xlu0 %520
    %v522 = vsel %vm494, %v471, -inf
    %523 = vmax.xlane.f32.xlu0 %v522
    %v524 = vpop.xlane.xlu0 %523
    %v525 = vsel %vm494, %v472, -inf
    %526 = vmax.xlane.f32.xlu0 %v525
    %v527 = vpop.xlane.xlu0 %526
    %v528 = vsel %vm494, %v473, -inf
    %529 = vmax.xlane.f32.xlu0 %v528
    %v530 = vpop.xlane.xlu0 %529
    %v531 = vsel %vm494, %v474, -inf
    %532 = vmax.xlane.f32.xlu0 %v531
    %v533 = vpop.xlane.xlu0 %532
    %v534 = vsel %vm494, %v475, -inf
    %535 = vmax.xlane.f32.xlu0 %v534
    %v536 = vpop.xlane.xlu0 %535
    %v537 = vsel %vm494, %v476, -inf
    %538 = vmax.xlane.f32.xlu0 %v537
    %v539 = vpop.xlane.xlu0 %538
    %v540 = vsel %vm494, %v477, -inf
    %541 = vmax.xlane.f32.xlu0 %v540
    %v542 = vpop.xlane.xlu0 %541
    %v543 = vsel %vm494, %v478, -inf
    %544 = vmax.xlane.f32.xlu0 %v543
    %v545 = vpop.xlane.xlu0 %544
    %v546 = vsel %vm494, %v479, -inf
    %547 = vmax.xlane.f32.xlu0 %v546
    %v548 = vpop.xlane.xlu0 %547
    %v549 = vsel %vm494, %v480, -inf
    %550 = vmax.xlane.f32.xlu0 %v549
    %v551 = vpop.xlane.xlu0 %550
    %v552 = vsel %vm494, %v481, -inf
    %553 = vmax.xlane.f32.xlu0 %v552
    %v554 = vpop.xlane.xlu0 %553
    %v555 = vsel %vm494, %v482, -inf
    %556 = vmax.xlane.f32.xlu0 %v555
    %v557 = vpop.xlane.xlu0 %556
    %v558 = vsel %vm494, %v483, -inf
    %559 = vmax.xlane.f32.xlu0 %v558
    %v560 = vpop.xlane.xlu0 %559
    %v561 = vsel %vm494, %v484, -inf
    %562 = vmax.xlane.f32.xlu0 %v561
    %v563 = vpop.xlane.xlu0 %562
    %v564 = vsel %vm494, %v485, -inf
    %565 = vmax.xlane.f32.xlu0 %v564
    %v566 = vpop.xlane.xlu0 %565
    %v567 = vsel %vm494, %v486, -inf
    %568 = vmax.xlane.f32.xlu0 %v567
    %v569 = vpop.xlane.xlu0 %568
    %v570 = vsel %vm494, %v487, -inf
    %571 = vmax.xlane.f32.xlu0 %v570
    %v572 = vpop.xlane.xlu0 %571
    %v573 = vsel %vm494, %v488, -inf
    %574 = vmax.xlane.f32.xlu0 %v573
    %v575 = vpop.xlane.xlu0 %574
    %v576 = vsel %vm494, %v489, -inf
    %577 = vmax.xlane.f32.xlu0 %v576
    %v578 = vpop.xlane.xlu0 %577
    %v579 = vsel %vm494, %v490, -inf
    %580 = vmax.xlane.f32.xlu0 %v579
    %v581 = vpop.xlane.xlu0 %580
    %v582 = vsel %vm494, %v491, -inf
    %583 = vmax.xlane.f32.xlu0 %v582
    %v584 = vpop.xlane.xlu0 %583
    %v585 = vsel %vm494, %v492, -inf
    %586 = vmax.xlane.f32.xlu0 %v585
    %v587 = vpop.xlane.xlu0 %586
    %v588 = vsel %vm494, %v493, -inf
    %589 = vmax.xlane.f32.xlu0 %v588
    %v590 = vpop.xlane.xlu0 %589
    %v591 = vsub.f32 %v462, %v497
    %v592 = vsub.f32 %v463, %v500
    %v593 = vsub.f32 %v464, %v503
    %v594 = vsub.f32 %v465, %v506
    %v595 = vsub.f32 %v466, %v509
    %v596 = vsub.f32 %v467, %v512
    %v597 = vsub.f32 %v468, %v515
    %v598 = vsub.f32 %v469, %v518
    %v599 = vsub.f32 %v470, %v521
    %v600 = vsub.f32 %v471, %v524
    %v601 = vsub.f32 %v472, %v527
    %v602 = vsub.f32 %v473, %v530
    %v603 = vsub.f32 %v474, %v533
    %v604 = vsub.f32 %v475, %v536
    %v605 = vsub.f32 %v476, %v539
    %v606 = vsub.f32 %v477, %v542
    %v607 = vsub.f32 %v478, %v545
    %v608 = vsub.f32 %v479, %v548
    %v609 = vsub.f32 %v480, %v551
    %v610 = vsub.f32 %v481, %v554
    %v611 = vsub.f32 %v482, %v557
    %v612 = vsub.f32 %v483, %v560
    %v613 = vsub.f32 %v484, %v563
    %v614 = vsub.f32 %v485, %v566
    %v615 = vsub.f32 %v486, %v569
    %v616 = vsub.f32 %v487, %v572
    %v617 = vsub.f32 %v488, %v575
    %v618 = vsub.f32 %v489, %v578
    %v619 = vsub.f32 %v490, %v581
    %v620 = vsub.f32 %v491, %v584
    %v621 = vsub.f32 %v492, %v587
    %v622 = vsub.f32 %v493, %v590
    %v623 = vmul.f32 %v591, 1.442695
    %v624 = vpow.pop %v623
    %v625 = vmul.f32 %v592, 1.442695
    %v626 = vpow.pop %v625
    %v627 = vmul.f32 %v593, 1.442695
    %v628 = vpow.pop %v627
    %v629 = vmul.f32 %v594, 1.442695
    %v630 = vpow.pop %v629
    %v631 = vmul.f32 %v595, 1.442695
    %v632 = vpow.pop %v631
    %v633 = vmul.f32 %v596, 1.442695
    %v634 = vpow.pop %v633
    %v635 = vmul.f32 %v597, 1.442695
    %v636 = vpow.pop %v635
    %v637 = vmul.f32 %v598, 1.442695
    %v638 = vpow.pop %v637
    %v639 = vmul.f32 %v599, 1.442695
    %v640 = vpow.pop %v639
    %v641 = vmul.f32 %v600, 1.442695
    %v642 = vpow.pop %v641
    %v643 = vmul.f32 %v601, 1.442695
    %v644 = vpow.pop %v643
    %v645 = vmul.f32 %v602, 1.442695
    %v646 = vpow.pop %v645
    %v647 = vmul.f32 %v603, 1.442695
    %v648 = vpow.pop %v647
    %v649 = vmul.f32 %v604, 1.442695
    %v650 = vpow.pop %v649
    %v651 = vmul.f32 %v605, 1.442695
    %v652 = vpow.pop %v651
    %v653 = vmul.f32 %v606, 1.442695
    %v654 = vpow.pop %v653
    %v655 = vmul.f32 %v607, 1.442695
    %v656 = vpow.pop %v655
    %v657 = vmul.f32 %v608, 1.442695
    %v658 = vpow.pop %v657
    %v659 = vmul.f32 %v609, 1.442695
    %v660 = vpow.pop %v659
    %v661 = vmul.f32 %v610, 1.442695
    %v662 = vpow.pop %v661
    %v663 = vmul.f32 %v611, 1.442695
    %v664 = vpow.pop %v663
    %v665 = vmul.f32 %v612, 1.442695
    %v666 = vpow.pop %v665
    %v667 = vmul.f32 %v613, 1.442695
    %v668 = vpow.pop %v667
    %v669 = vmul.f32 %v614, 1.442695
    %v670 = vpow.pop %v669
    %v671 = vmul.f32 %v615, 1.442695
    %v672 = vpow.pop %v671
    %v673 = vmul.f32 %v616, 1.442695
    %v674 = vpow.pop %v673
    %v675 = vmul.f32 %v617, 1.442695
    %v676 = vpow.pop %v675
    %v677 = vmul.f32 %v618, 1.442695
    %v678 = vpow.pop %v677
    %v679 = vmul.f32 %v619, 1.442695
    %v680 = vpow.pop %v679
    %v681 = vmul.f32 %v620, 1.442695
    %v682 = vpow.pop %v681
    %v683 = vmul.f32 %v621, 1.442695
    %v684 = vpow.pop %v683
    %v685 = vmul.f32 %v622, 1.442695
    %v686 = vpow.pop %v685
    %v687 = vsel %vm494, %v624, 0.0
    %688 = vadd.xlane.f32.xlu0 %v687
    %v689 = vpop.xlane.xlu0 %688
    %v690 = vsel %vm494, %v626, 0.0
    %691 = vadd.xlane.f32.xlu0 %v690
    %v692 = vpop.xlane.xlu0 %691
    %v693 = vsel %vm494, %v628, 0.0
    %694 = vadd.xlane.f32.xlu0 %v693
    %v695 = vpop.xlane.xlu0 %694
    %v696 = vsel %vm494, %v630, 0.0
    %697 = vadd.xlane.f32.xlu0 %v696
    %v698 = vpop.xlane.xlu0 %697
    %v699 = vsel %vm494, %v632, 0.0
    %700 = vadd.xlane.f32.xlu0 %v699
    %v701 = vpop.xlane.xlu0 %700
    %v702 = vsel %vm494, %v634, 0.0
    %703 = vadd.xlane.f32.xlu0 %v702
    %v704 = vpop.xlane.xlu0 %703
    %v705 = vsel %vm494, %v636, 0.0
    %706 = vadd.xlane.f32.xlu0 %v705
    %v707 = vpop.xlane.xlu0 %706
    %v708 = vsel %vm494, %v638, 0.0
    %709 = vadd.xlane.f32.xlu0 %v708
    %v710 = vpop.xlane.xlu0 %709
    %v711 = vsel %vm494, %v640, 0.0
    %712 = vadd.xlane.f32.xlu0 %v711
    %v713 = vpop.xlane.xlu0 %712
    %v714 = vsel %vm494, %v642, 0.0
    %715 = vadd.xlane.f32.xlu0 %v714
    %v716 = vpop.xlane.xlu0 %715
    %v717 = vsel %vm494, %v644, 0.0
    %718 = vadd.xlane.f32.xlu0 %v717
    %v719 = vpop.xlane.xlu0 %718
    %v720 = vsel %vm494, %v646, 0.0
    %721 = vadd.xlane.f32.xlu0 %v720
    %v722 = vpop.xlane.xlu0 %721
    %v723 = vsel %vm494, %v648, 0.0
    %724 = vadd.xlane.f32.xlu0 %v723
    %v725 = vpop.xlane.xlu0 %724
    %v726 = vsel %vm494, %v650, 0.0
    %727 = vadd.xlane.f32.xlu0 %v726
    %v728 = vpop.xlane.xlu0 %727
    %v729 = vsel %vm494, %v652, 0.0
    %730 = vadd.xlane.f32.xlu0 %v729
    %v731 = vpop.xlane.xlu0 %730
    %v732 = vsel %vm494, %v654, 0.0
    %733 = vadd.xlane.f32.xlu0 %v732
    %v734 = vpop.xlane.xlu0 %733
    %v735 = vsel %vm494, %v656, 0.0
    %736 = vadd.xlane.f32.xlu0 %v735
    %v737 = vpop.xlane.xlu0 %736
    %v738 = vsel %vm494, %v658, 0.0
    %739 = vadd.xlane.f32.xlu0 %v738
    %v740 = vpop.xlane.xlu0 %739
    %v741 = vsel %vm494, %v660, 0.0
    %742 = vadd.xlane.f32.xlu0 %v741
    %v743 = vpop.xlane.xlu0 %742
    %v744 = vsel %vm494, %v662, 0.0
    %745 = vadd.xlane.f32.xlu0 %v744
    %v746 = vpop.xlane.xlu0 %745
    %v747 = vsel %vm494, %v664, 0.0
    %748 = vadd.xlane.f32.xlu0 %v747
    %v749 = vpop.xlane.xlu0 %748
    %v750 = vsel %vm494, %v666, 0.0
    %751 = vadd.xlane.f32.xlu0 %v750
    %v752 = vpop.xlane.xlu0 %751
    %v753 = vsel %vm494, %v668, 0.0
    %754 = vadd.xlane.f32.xlu0 %v753
    %v755 = vpop.xlane.xlu0 %754
    %v756 = vsel %vm494, %v670, 0.0
    %757 = vadd.xlane.f32.xlu0 %v756
    %v758 = vpop.xlane.xlu0 %757
    %v759 = vsel %vm494, %v672, 0.0
    %760 = vadd.xlane.f32.xlu0 %v759
    %v761 = vpop.xlane.xlu0 %760
    %v762 = vsel %vm494, %v674, 0.0
    %763 = vadd.xlane.f32.xlu0 %v762
    %v764 = vpop.xlane.xlu0 %763
    %v765 = vsel %vm494, %v676, 0.0
    %766 = vadd.xlane.f32.xlu0 %v765
    %v767 = vpop.xlane.xlu0 %766
    %v768 = vsel %vm494, %v678, 0.0
    %769 = vadd.xlane.f32.xlu0 %v768
    %v770 = vpop.xlane.xlu0 %769
    %v771 = vsel %vm494, %v680, 0.0
    %772 = vadd.xlane.f32.xlu0 %v771
    %v773 = vpop.xlane.xlu0 %772
    %v774 = vsel %vm494, %v682, 0.0
    %775 = vadd.xlane.f32.xlu0 %v774
    %v776 = vpop.xlane.xlu0 %775
    %v777 = vsel %vm494, %v684, 0.0
    %778 = vadd.xlane.f32.xlu0 %v777
    %v779 = vpop.xlane.xlu0 %778
    %v780 = vsel %vm494, %v686, 0.0
    %781 = vadd.xlane.f32.xlu0 %v780
    %v782 = vpop.xlane.xlu0 %781
    %v783 = vrcp.pop %v689
    %v784 = vrcp.pop %v692
    %v785 = vrcp.pop %v695
    %v786 = vrcp.pop %v698
    %v787 = vrcp.pop %v701
    %v788 = vrcp.pop %v704
    %v789 = vrcp.pop %v707
    %v790 = vrcp.pop %v710
    %v791 = vrcp.pop %v713
    %v792 = vrcp.pop %v716
    %v793 = vrcp.pop %v719
    %v794 = vrcp.pop %v722
    %v795 = vrcp.pop %v725
    %v796 = vrcp.pop %v728
    %v797 = vrcp.pop %v731
    %v798 = vrcp.pop %v734
    %v799 = vrcp.pop %v737
    %v800 = vrcp.pop %v740
    %v801 = vrcp.pop %v743
    %v802 = vrcp.pop %v746
    %v803 = vrcp.pop %v749
    %v804 = vrcp.pop %v752
    %v805 = vrcp.pop %v755
    %v806 = vrcp.pop %v758
    %v807 = vrcp.pop %v761
    %v808 = vrcp.pop %v764
    %v809 = vrcp.pop %v767
    %v810 = vrcp.pop %v770
    %v811 = vrcp.pop %v773
    %v812 = vrcp.pop %v776
    %v813 = vrcp.pop %v779
    %v814 = vrcp.pop %v782
    %v815 = vmul.f32 %v624, %v783
    %v816 = vmul.f32 %v626, %v784
    %v817 = vmul.f32 %v628, %v785
    %v818 = vmul.f32 %v630, %v786
    %v819 = vmul.f32 %v632, %v787
    %v820 = vmul.f32 %v634, %v788
    %v821 = vmul.f32 %v636, %v789
    %v822 = vmul.f32 %v638, %v790
    %v823 = vmul.f32 %v640, %v791
    %v824 = vmul.f32 %v642, %v792
    %v825 = vmul.f32 %v644, %v793
    %v826 = vmul.f32 %v646, %v794
    %v827 = vmul.f32 %v648, %v795
    %v828 = vmul.f32 %v650, %v796
    %v829 = vmul.f32 %v652, %v797
    %v830 = vmul.f32 %v654, %v798
    %v831 = vmul.f32 %v656, %v799
    %v832 = vmul.f32 %v658, %v800
    %v833 = vmul.f32 %v660, %v801
    %v834 = vmul.f32 %v662, %v802
    %v835 = vmul.f32 %v664, %v803
    %v836 = vmul.f32 %v666, %v804
    %v837 = vmul.f32 %v668, %v805
    %v838 = vmul.f32 %v670, %v806
    %v839 = vmul.f32 %v672, %v807
    %v840 = vmul.f32 %v674, %v808
    %v841 = vmul.f32 %v676, %v809
    %v842 = vmul.f32 %v678, %v810
    %v843 = vmul.f32 %v680, %v811
    %v844 = vmul.f32 %v682, %v812
    %v845 = vmul.f32 %v684, %v813
    %v846 = vmul.f32 %v686, %v814
    %847 = vrot.lane.b32.xlu0 %v140, 64
    %v848 = vpop.permute.xlu0 %847
    %849 = vrot.lane.b32.xlu0 %v143, 64
    %v850 = vpop.permute.xlu0 %849
    %v854 = vsel %vm494, %v815, 0
    %v857 = vsel %vm494, %v816, 0
    %v860 = vsel %vm494, %v817, 0
    %v863 = vsel %vm494, %v818, 0
    %v866 = vsel %vm494, %v819, 0
    %v869 = vsel %vm494, %v820, 0
    %v872 = vsel %vm494, %v821, 0
    %v875 = vsel %vm494, %v822, 0
    %v878 = vsel %vm494, %v823, 0
    %v881 = vsel %vm494, %v824, 0
    %v884 = vsel %vm494, %v825, 0
    %v887 = vsel %vm494, %v826, 0
    %v890 = vsel %vm494, %v827, 0
    %v893 = vsel %vm494, %v828, 0
    %v896 = vsel %vm494, %v829, 0
    %v899 = vsel %vm494, %v830, 0
    %901 = vmatpush.msra.mxu0 0.0
    %902 = vmatpush.msra.mxu0 0.0
    %903 = vmatpush.msra.mxu0 0.0
    %904 = vmatpush.msra.mxu0 0.0
    %905 = vmatpush.msra.mxu0 0.0
    %906 = vmatpush.msra.mxu0 0.0
    %907 = vmatpush.msra.mxu0 0.0
    %908 = vmatpush.msra.mxu0 0.0
    %909 = vmatpush.msra.mxu0 0.0
    %910 = vmatpush.msra.mxu0 0.0
    %911 = vmatpush.msra.mxu0 0.0
    %912 = vmatpush.msra.mxu0 0.0
    %913 = vmatpush.msra.mxu0 0.0
    %914 = vmatpush.msra.mxu0 0.0
    %915 = vmatpush.msra.mxu0 %v850
    %916 = vmatpush.msra.mxu0 %v848
    %917 = vmatmul.f32.gmra.mxu0 %v854
    %v918 = vpop.f32.mrf.mxu0
    %v919 = vadd.f32 0.0, %v918
    %920 = vmatmul.f32.gmra.mxu0 %v857
    %v921 = vpop.f32.mrf.mxu0
    %v922 = vadd.f32 0.0, %v921
    %923 = vmatmul.f32.gmra.mxu0 %v860
    %v924 = vpop.f32.mrf.mxu0
    %v925 = vadd.f32 0.0, %v924
    %926 = vmatmul.f32.gmra.mxu0 %v863
    %v927 = vpop.f32.mrf.mxu0
    %v928 = vadd.f32 0.0, %v927
    %929 = vmatmul.f32.gmra.mxu0 %v866
    %v930 = vpop.f32.mrf.mxu0
    %v931 = vadd.f32 0.0, %v930
    %932 = vmatmul.f32.gmra.mxu0 %v869
    %v933 = vpop.f32.mrf.mxu0
    %v934 = vadd.f32 0.0, %v933
    %935 = vmatmul.f32.gmra.mxu0 %v872
    %v936 = vpop.f32.mrf.mxu0
    %v937 = vadd.f32 0.0, %v936
    %938 = vmatmul.f32.gmra.mxu0 %v875
    %v939 = vpop.f32.mrf.mxu0
    %v940 = vadd.f32 0.0, %v939
    %941 = vmatmul.f32.gmra.mxu0 %v878
    %v942 = vpop.f32.mrf.mxu0
    %v943 = vadd.f32 0.0, %v942
    %944 = vmatmul.f32.gmra.mxu0 %v881
    %v945 = vpop.f32.mrf.mxu0
    %v946 = vadd.f32 0.0, %v945
    %947 = vmatmul.f32.gmra.mxu0 %v884
    %v948 = vpop.f32.mrf.mxu0
    %v949 = vadd.f32 0.0, %v948
    %950 = vmatmul.f32.gmra.mxu0 %v887
    %v951 = vpop.f32.mrf.mxu0
    %v952 = vadd.f32 0.0, %v951
    %953 = vmatmul.f32.gmra.mxu0 %v890
    %v954 = vpop.f32.mrf.mxu0
    %v955 = vadd.f32 0.0, %v954
    %956 = vmatmul.f32.gmra.mxu0 %v893
    %v957 = vpop.f32.mrf.mxu0
    %v958 = vadd.f32 0.0, %v957
    %959 = vmatmul.f32.gmra.mxu0 %v896
    %v960 = vpop.f32.mrf.mxu0
    %v961 = vadd.f32 0.0, %v960
    %962 = vmatmul.f32.gmra.mxu0 %v899
    %v963 = vpop.f32.mrf.mxu0
    %v964 = vadd.f32 0.0, %v963
    %965 = vdwg.mxu0
    %966 = vrot.lane.b32.xlu0 %v146, 64
    %v967 = vpop.permute.xlu0 %966
    %968 = vrot.lane.b32.xlu0 %v149, 64
    %v969 = vpop.permute.xlu0 %968
    %v973 = vsel %vm494, %v831, 0
    %v976 = vsel %vm494, %v832, 0
    %v979 = vsel %vm494, %v833, 0
    %v982 = vsel %vm494, %v834, 0
    %v985 = vsel %vm494, %v835, 0
    %v988 = vsel %vm494, %v836, 0
    %v991 = vsel %vm494, %v837, 0
    %v994 = vsel %vm494, %v838, 0
    %v997 = vsel %vm494, %v839, 0
    %v1000 = vsel %vm494, %v840, 0
    %v1003 = vsel %vm494, %v841, 0
    %v1006 = vsel %vm494, %v842, 0
    %v1009 = vsel %vm494, %v843, 0
    %v1012 = vsel %vm494, %v844, 0
    %v1015 = vsel %vm494, %v845, 0
    %v1018 = vsel %vm494, %v846, 0
    %1020 = vmatpush.msra.mxu0 0.0
    %1021 = vmatpush.msra.mxu0 0.0
    %1022 = vmatpush.msra.mxu0 0.0
    %1023 = vmatpush.msra.mxu0 0.0
    %1024 = vmatpush.msra.mxu0 0.0
    %1025 = vmatpush.msra.mxu0 0.0
    %1026 = vmatpush.msra.mxu0 0.0
    %1027 = vmatpush.msra.mxu0 0.0
    %1028 = vmatpush.msra.mxu0 0.0
    %1029 = vmatpush.msra.mxu0 0.0
    %1030 = vmatpush.msra.mxu0 0.0
    %1031 = vmatpush.msra.mxu0 0.0
    %1032 = vmatpush.msra.mxu0 0.0
    %1033 = vmatpush.msra.mxu0 0.0
    %1034 = vmatpush.msra.mxu0 %v969
    %1035 = vmatpush.msra.mxu0 %v967
    %1036 = vmatmul.f32.gmra.mxu0 %v973
    %v1037 = vpop.f32.mrf.mxu0
    %v1038 = vadd.f32 0.0, %v1037
    %1039 = vmatmul.f32.gmra.mxu0 %v976
    %v1040 = vpop.f32.mrf.mxu0
    %v1041 = vadd.f32 0.0, %v1040
    %1042 = vmatmul.f32.gmra.mxu0 %v979
    %v1043 = vpop.f32.mrf.mxu0
    %v1044 = vadd.f32 0.0, %v1043
    %1045 = vmatmul.f32.gmra.mxu0 %v982
    %v1046 = vpop.f32.mrf.mxu0
    %v1047 = vadd.f32 0.0, %v1046
    %1048 = vmatmul.f32.gmra.mxu0 %v985
    %v1049 = vpop.f32.mrf.mxu0
    %v1050 = vadd.f32 0.0, %v1049
    %1051 = vmatmul.f32.gmra.mxu0 %v988
    %v1052 = vpop.f32.mrf.mxu0
    %v1053 = vadd.f32 0.0, %v1052
    %1054 = vmatmul.f32.gmra.mxu0 %v991
    %v1055 = vpop.f32.mrf.mxu0
    %v1056 = vadd.f32 0.0, %v1055
    %1057 = vmatmul.f32.gmra.mxu0 %v994
    %v1058 = vpop.f32.mrf.mxu0
    %v1059 = vadd.f32 0.0, %v1058
    %1060 = vmatmul.f32.gmra.mxu0 %v997
    %v1061 = vpop.f32.mrf.mxu0
    %v1062 = vadd.f32 0.0, %v1061
    %1063 = vmatmul.f32.gmra.mxu0 %v1000
    %v1064 = vpop.f32.mrf.mxu0
    %v1065 = vadd.f32 0.0, %v1064
    %1066 = vmatmul.f32.gmra.mxu0 %v1003
    %v1067 = vpop.f32.mrf.mxu0
    %v1068 = vadd.f32 0.0, %v1067
    %1069 = vmatmul.f32.gmra.mxu0 %v1006
    %v1070 = vpop.f32.mrf.mxu0
    %v1071 = vadd.f32 0.0, %v1070
    %1072 = vmatmul.f32.gmra.mxu0 %v1009
    %v1073 = vpop.f32.mrf.mxu0
    %v1074 = vadd.f32 0.0, %v1073
    %1075 = vmatmul.f32.gmra.mxu0 %v1012
    %v1076 = vpop.f32.mrf.mxu0
    %v1077 = vadd.f32 0.0, %v1076
    %1078 = vmatmul.f32.gmra.mxu0 %v1015
    %v1079 = vpop.f32.mrf.mxu0
    %v1080 = vadd.f32 0.0, %v1079
    %1081 = vmatmul.f32.gmra.mxu0 %v1018
    %v1082 = vpop.f32.mrf.mxu0
    %v1083 = vadd.f32 0.0, %v1082
    %1084 = vdwg.mxu0
    %v1085 = vmul.f32 %v919, %v48
    %v1086 = vmul.f32 %v922, %v49
    %v1087 = vmul.f32 %v925, %v50
    %v1088 = vmul.f32 %v928, %v51
    %v1089 = vmul.f32 %v931, %v52
    %v1090 = vmul.f32 %v934, %v53
    %v1091 = vmul.f32 %v937, %v54
    %v1092 = vmul.f32 %v940, %v55
    %v1093 = vmul.f32 %v943, %v56
    %v1094 = vmul.f32 %v946, %v57
    %v1095 = vmul.f32 %v949, %v58
    %v1096 = vmul.f32 %v952, %v59
    %v1097 = vmul.f32 %v955, %v60
    %v1098 = vmul.f32 %v958, %v61
    %v1099 = vmul.f32 %v961, %v62
    %v1100 = vmul.f32 %v964, %v63
    %v1101 = vmul.f32 %v1038, %v48
    %v1102 = vmul.f32 %v1041, %v49
    %v1103 = vmul.f32 %v1044, %v50
    %v1104 = vmul.f32 %v1047, %v51
    %v1105 = vmul.f32 %v1050, %v52
    %v1106 = vmul.f32 %v1053, %v53
    %v1107 = vmul.f32 %v1056, %v54
    %v1108 = vmul.f32 %v1059, %v55
    %v1109 = vmul.f32 %v1062, %v56
    %v1110 = vmul.f32 %v1065, %v57
    %v1111 = vmul.f32 %v1068, %v58
    %v1112 = vmul.f32 %v1071, %v59
    %v1113 = vmul.f32 %v1074, %v60
    %v1114 = vmul.f32 %v1077, %v61
    %v1115 = vmul.f32 %v1080, %v62
    %v1116 = vmul.f32 %v1083, %v63
    %v1117 = vsel %vm183, %v1085, 0.0
    %v1118 = vsel %vm183, %v1086, 0.0
    %v1119 = vadd.f32 %v1117, %v1118
    %v1120 = vsel %vm183, %v1087, 0.0
    %v1121 = vadd.f32 %v1119, %v1120
    %v1122 = vsel %vm183, %v1088, 0.0
    %v1123 = vadd.f32 %v1121, %v1122
    %v1124 = vsel %vm183, %v1089, 0.0
    %v1125 = vadd.f32 %v1123, %v1124
    %v1126 = vsel %vm183, %v1090, 0.0
    %v1127 = vadd.f32 %v1125, %v1126
    %v1128 = vsel %vm183, %v1091, 0.0
    %v1129 = vadd.f32 %v1127, %v1128
    %v1130 = vsel %vm183, %v1092, 0.0
    %v1131 = vadd.f32 %v1129, %v1130
    %v1132 = vsel %vm183, %v1093, 0.0
    %v1133 = vadd.f32 %v1131, %v1132
    %v1134 = vsel %vm183, %v1094, 0.0
    %v1135 = vadd.f32 %v1133, %v1134
    %v1136 = vsel %vm183, %v1095, 0.0
    %v1137 = vadd.f32 %v1135, %v1136
    %v1138 = vsel %vm183, %v1096, 0.0
    %v1139 = vadd.f32 %v1137, %v1138
    %v1140 = vsel %vm183, %v1097, 0.0
    %v1141 = vadd.f32 %v1139, %v1140
    %v1142 = vsel %vm183, %v1098, 0.0
    %v1143 = vadd.f32 %v1141, %v1142
    %v1144 = vsel %vm183, %v1099, 0.0
    %v1145 = vadd.f32 %v1143, %v1144
    %v1146 = vsel %vm183, %v1100, 0.0
    %v1147 = vadd.f32 %v1145, %v1146
    %v1148 = vsel %vm183, %v1101, 0.0
    %v1149 = vsel %vm183, %v1102, 0.0
    %v1150 = vadd.f32 %v1148, %v1149
    %v1151 = vsel %vm183, %v1103, 0.0
    %v1152 = vadd.f32 %v1150, %v1151
    %v1153 = vsel %vm183, %v1104, 0.0
    %v1154 = vadd.f32 %v1152, %v1153
    %v1155 = vsel %vm183, %v1105, 0.0
    %v1156 = vadd.f32 %v1154, %v1155
    %v1157 = vsel %vm183, %v1106, 0.0
    %v1158 = vadd.f32 %v1156, %v1157
    %v1159 = vsel %vm183, %v1107, 0.0
    %v1160 = vadd.f32 %v1158, %v1159
    %v1161 = vsel %vm183, %v1108, 0.0
    %v1162 = vadd.f32 %v1160, %v1161
    %v1163 = vsel %vm183, %v1109, 0.0
    %v1164 = vadd.f32 %v1162, %v1163
    %v1165 = vsel %vm183, %v1110, 0.0
    %v1166 = vadd.f32 %v1164, %v1165
    %v1167 = vsel %vm183, %v1111, 0.0
    %v1168 = vadd.f32 %v1166, %v1167
    %v1169 = vsel %vm183, %v1112, 0.0
    %v1170 = vadd.f32 %v1168, %v1169
    %v1171 = vsel %vm183, %v1113, 0.0
    %v1172 = vadd.f32 %v1170, %v1171
    %v1173 = vsel %vm183, %v1114, 0.0
    %v1174 = vadd.f32 %v1172, %v1173
    %v1175 = vsel %vm183, %v1115, 0.0
    %v1176 = vadd.f32 %v1174, %v1175
    %v1177 = vsel %vm183, %v1116, 0.0
    %v1178 = vadd.f32 %v1176, %v1177
    %v1179 = vperm.slane %v42, 0
    %v1181 = vsel %vm183, %v1147, 0
    %v1184 = vsel %vm183, %v1178, 0
    %1186 = vmatpush.msra.mxu0 0.0
    %1187 = vmatpush.msra.mxu0 0.0
    %1188 = vmatpush.msra.mxu0 0.0
    %1189 = vmatpush.msra.mxu0 0.0
    %1190 = vmatpush.msra.mxu0 0.0
    %1191 = vmatpush.msra.mxu0 0.0
    %1192 = vmatpush.msra.mxu0 0.0
    %1193 = vmatpush.msra.mxu0 0.0
    %1194 = vmatpush.msra.mxu0 %v33
    %1195 = vmatpush.msra.mxu0 %v32
    %1196 = vmatpush.msra.mxu0 %v31
    %1197 = vmatpush.msra.mxu0 %v30
    %1198 = vmatpush.msra.mxu0 %v29
    %1199 = vmatpush.msra.mxu0 %v28
    %1200 = vmatpush.msra.mxu0 %v27
    %1201 = vmatpush.msra.mxu0 %v26
    %1202 = vmatmul.f32.gmra.mxu0 %v1181
    %v1203 = vpop.f32.mrf.mxu0
    %v1204 = vadd.f32 %v1179, %v1203
    %1205 = vmatmul.f32.gmra.mxu0 %v1184
    %v1206 = vpop.f32.mrf.mxu0
    %v1207 = vadd.f32 %v1179, %v1206
    %1208 = vdwg.mxu0
    %v1209 = vsel %vm183, %v1204, 0.0
    %1210 = vadd.xlane.f32.xlu0 %v1209
    %v1211 = vpop.xlane.xlu0 %1210
    %v1212 = vsel %vm183, %v1207, 0.0
    %1213 = vadd.xlane.f32.xlu0 %v1212
    %v1214 = vpop.xlane.xlu0 %1213
    %v1215 = vrcp.pop 64.0
    %v1216 = vmul.f32 64.0, %v1215
    %v1217 = vsub.f32 1.0, %v1216
    %v1218 = vmul.f32 %v1215, %v1217
    %v1219 = vadd.f32 %v1215, %v1218
    %vm1220 = vweird.f32 %v1215
    %v1221 = vsel %vm1220, %v1215, %v1219
    %v1222 = vmul.f32 %v1211, %v1221
    %v1223 = vmul.f32 %v1214, %v1221
    %v1224 = vsub.f32 %v1204, %v1222
    %v1225 = vsub.f32 %v1207, %v1223
    %v1226 = vmul.f32 %v1224, %v1224
    %v1227 = vmul.f32 %v1225, %v1225
    %v1228 = vsel %vm183, %v1226, 0.0
    %1229 = vadd.xlane.f32.xlu0 %v1228
    %v1230 = vpop.xlane.xlu0 %1229
    %v1231 = vsel %vm183, %v1227, 0.0
    %1232 = vadd.xlane.f32.xlu0 %v1231
    %v1233 = vpop.xlane.xlu0 %1232
    %v1234 = vmul.f32 %v1230, %v1221
    %v1235 = vmul.f32 %v1233, %v1221
    %v1236 = vadd.f32 %v1234, 1e-05
    %v1237 = vadd.f32 %v1235, 1e-05
    %v1238 = vrsqrt.pop %v1236
    %v1239 = vmul.f32 %v1238, %v1236
    %v1240 = vmul.f32 %v1239, %v1238
    %v1241 = vmul.f32 0.5, %v1240
    %v1242 = vsub.f32 1.5, %v1241
    %v1243 = vmul.f32 %v1238, %v1242
    %vm1244 = vweird.f32 %v1236
    %vm1245 = vweird.f32 %v1238
    %vm1246 = vmor %vm1244, %vm1245
    %v1247 = vsel %vm1246, %v1238, %v1243
    %v1248 = vrsqrt.pop %v1237
    %v1249 = vmul.f32 %v1248, %v1237
    %v1250 = vmul.f32 %v1249, %v1248
    %v1251 = vmul.f32 0.5, %v1250
    %v1252 = vsub.f32 1.5, %v1251
    %v1253 = vmul.f32 %v1248, %v1252
    %vm1254 = vweird.f32 %v1237
    %vm1255 = vweird.f32 %v1248
    %vm1256 = vmor %vm1254, %vm1255
    %v1257 = vsel %vm1256, %v1248, %v1253
    %v1258 = vmul.f32 %v1224, %v1247
    %v1259 = vmul.f32 %v1225, %v1257
    %v1260 = vperm.slane %v43, 0
    %v1261 = vmul.f32 %v1258, %v1260
    %v1262 = vmul.f32 %v1259, %v1260
    %v1263 = vperm.slane %v44, 0
    %v1264 = vadd.f32 %v1261, %v1263
    %v1265 = vadd.f32 %v1262, %v1263
    %v1266 = vmax.f32 %v1264, 0.0
    %v1267 = vmax.f32 %v1265, 0.0
    %v1269 = vsel %vm183, %v1266, 0
    %v1272 = vsel %vm183, %v1267, 0
    %1274 = vmatpush.msra.mxu0 0.0
    %1275 = vmatpush.msra.mxu0 0.0
    %1276 = vmatpush.msra.mxu0 0.0
    %1277 = vmatpush.msra.mxu0 0.0
    %1278 = vmatpush.msra.mxu0 0.0
    %1279 = vmatpush.msra.mxu0 0.0
    %1280 = vmatpush.msra.mxu0 0.0
    %1281 = vmatpush.msra.mxu0 0.0
    %1282 = vmatpush.msra.mxu0 %v41
    %1283 = vmatpush.msra.mxu0 %v40
    %1284 = vmatpush.msra.mxu0 %v39
    %1285 = vmatpush.msra.mxu0 %v38
    %1286 = vmatpush.msra.mxu0 %v37
    %1287 = vmatpush.msra.mxu0 %v36
    %1288 = vmatpush.msra.mxu0 %v35
    %1289 = vmatpush.msra.mxu0 %v34
    %1290 = vmatmul.f32.gmra.mxu0 %v1269
    %v1291 = vpop.f32.mrf.mxu0
    %v1292 = vadd.f32 0.0, %v1291
    %1293 = vmatmul.f32.gmra.mxu0 %v1272
    %v1294 = vpop.f32.mrf.mxu0
    %v1295 = vadd.f32 0.0, %v1294
    %1296 = vdwg.mxu0
    %v1297 = vperm.slane %v45, 0
    %v1298 = vadd.f32 %v1292, %v1297
    %v1299 = vadd.f32 %v1295, %v1297
    %vm1300 = vcmask 261120
    %v1301 = vsel %vm1300, %v1298, 0.0
    %1302 = vadd.xlane.f32.xlu0 %v1301
    %v1303 = vpop.xlane.xlu0 %1302
    %v1304 = vsel %vm1300, %v1299, 0.0
    %1305 = vadd.xlane.f32.xlu0 %v1304
    %v1306 = vpop.xlane.xlu0 %1305
    %v1307 = vrcp.pop 32.0
    %v1308 = vmul.f32 32.0, %v1307
    %v1309 = vsub.f32 1.0, %v1308
    %v1310 = vmul.f32 %v1307, %v1309
    %v1311 = vadd.f32 %v1307, %v1310
    %vm1312 = vweird.f32 %v1307
    %v1313 = vsel %vm1312, %v1307, %v1311
    %v1314 = vmul.f32 %v1303, %v1313
    %v1315 = vmul.f32 %v1306, %v1313
    %v1316 = vsub.f32 %v1298, %v1314
    %v1317 = vsub.f32 %v1299, %v1315
    %v1318 = vmul.f32 %v1316, %v1316
    %v1319 = vmul.f32 %v1317, %v1317
    %v1320 = vsel %vm1300, %v1318, 0.0
    %1321 = vadd.xlane.f32.xlu0 %v1320
    %v1322 = vpop.xlane.xlu0 %1321
    %v1323 = vsel %vm1300, %v1319, 0.0
    %1324 = vadd.xlane.f32.xlu0 %v1323
    %v1325 = vpop.xlane.xlu0 %1324
    %v1326 = vmul.f32 %v1322, %v1313
    %v1327 = vmul.f32 %v1325, %v1313
    %v1328 = vadd.f32 %v1326, 1e-05
    %v1329 = vadd.f32 %v1327, 1e-05
    %v1330 = vrsqrt.pop %v1328
    %v1331 = vmul.f32 %v1330, %v1328
    %v1332 = vmul.f32 %v1331, %v1330
    %v1333 = vmul.f32 0.5, %v1332
    %v1334 = vsub.f32 1.5, %v1333
    %v1335 = vmul.f32 %v1330, %v1334
    %vm1336 = vweird.f32 %v1328
    %vm1337 = vweird.f32 %v1330
    %vm1338 = vmor %vm1336, %vm1337
    %v1339 = vsel %vm1338, %v1330, %v1335
    %v1340 = vrsqrt.pop %v1329
    %v1341 = vmul.f32 %v1340, %v1329
    %v1342 = vmul.f32 %v1341, %v1340
    %v1343 = vmul.f32 0.5, %v1342
    %v1344 = vsub.f32 1.5, %v1343
    %v1345 = vmul.f32 %v1340, %v1344
    %vm1346 = vweird.f32 %v1329
    %vm1347 = vweird.f32 %v1340
    %vm1348 = vmor %vm1346, %vm1347
    %v1349 = vsel %vm1348, %v1340, %v1345
    %v1350 = vmul.f32 %v1316, %v1339
    %v1351 = vmul.f32 %v1317, %v1349
    %v1352 = vperm.slane %v46, 0
    %v1353 = vmul.f32 %v1350, %v1352
    %v1354 = vmul.f32 %v1351, %v1352
    %v1355 = vperm.slane %v47, 0
    %v1356 = vadd.f32 %v1353, %v1355
    %v1357 = vadd.f32 %v1354, %v1355
    %v1358 = vmax.f32 %v1356, 0.0
    %v1359 = vmax.f32 %v1357, 0.0
    %v1360 = vperm.slane %v73, 0
    %v1362 = vsel %vm1300, %v1358, 0
    %v1365 = vsel %vm1300, %v1359, 0
    %1367 = vmatpush.msra.mxu0 0.0
    %1368 = vmatpush.msra.mxu0 0.0
    %1369 = vmatpush.msra.mxu0 0.0
    %1370 = vmatpush.msra.mxu0 0.0
    %1371 = vmatpush.msra.mxu0 0.0
    %1372 = vmatpush.msra.mxu0 0.0
    %1373 = vmatpush.msra.mxu0 0.0
    %1374 = vmatpush.msra.mxu0 0.0
    %1375 = vmatpush.msra.mxu0 0.0
    %1376 = vmatpush.msra.mxu0 0.0
    %1377 = vmatpush.msra.mxu0 0.0
    %1378 = vmatpush.msra.mxu0 0.0
    %1379 = vmatpush.msra.mxu0 %v72
    %1380 = vmatpush.msra.mxu0 %v71
    %1381 = vmatpush.msra.mxu0 %v70
    %1382 = vmatpush.msra.mxu0 %v69
    %1383 = vmatmul.f32.gmra.mxu0 %v1362
    %v1384 = vpop.f32.mrf.mxu0
    %v1385 = vadd.f32 %v1360, %v1384
    %1386 = vmatmul.f32.gmra.mxu0 %v1365
    %v1387 = vpop.f32.mrf.mxu0
    %v1388 = vadd.f32 %v1360, %v1387
    %1389 = vdwg.mxu0
    %v1390 = vlaneseq
    %v1391 = vand.u32 %v1390, 127
    %vm1392 = vcmp.ge.s32.totalorder %v1391, 3
    %v1393 = vmax.f32 %v1385, 0.0
    %v1394 = vmax.f32 %v1388, 0.0
    %vm1395 = vcmp.ne.f32.partialorder %v1385, %v1385
    %vm1396 = vcmp.ne.f32.partialorder %v1388, %v1388
    %v1397 = vadd.f32 %v1385, 0.0
    %v1398 = vadd.f32 %v1388, 0.0
    %v1399 = vand.u32 2147483647, %v1385
    %v1400 = vand.u32 2147483647, %v1388
    %v1401 = vsub.f32 0.0, %v1399
    %v1402 = vsub.f32 0.0, %v1400
    %v1403 = vmul.f32 %v1401, 1.442695
    %v1404 = vpow.pop %v1403
    %v1405 = vmul.f32 %v1402, 1.442695
    %v1406 = vpow.pop %v1405
    %v1407 = vadd.f32 %v1404, 1.0
    %v1408 = vlog2.pop %v1407
    %v1409 = vmul.f32 %v1408, 0.6931472
    %v1410 = vmul.f32 -0.5, %v1404
    %v1411 = vadd.f32 %v1410, 1.0
    %v1412 = vmul.f32 %v1411, %v1404
    %v1413 = vand.u32 2147483647, %v1404
    %vm1414 = vcmp.lt.f32.partialorder %v1413, 0.0004427343
    %v1415 = vsel %vm1414, %v1412, %v1409
    %v1416 = vadd.f32 %v1406, 1.0
    %v1417 = vlog2.pop %v1416
    %v1418 = vmul.f32 %v1417, 0.6931472
    %v1419 = vmul.f32 -0.5, %v1406
    %v1420 = vadd.f32 %v1419, 1.0
    %v1421 = vmul.f32 %v1420, %v1406
    %v1422 = vand.u32 2147483647, %v1406
    %vm1423 = vcmp.lt.f32.partialorder %v1422, 0.0004427343
    %v1424 = vsel %vm1423, %v1421, %v1418
    %v1425 = vadd.f32 %v1393, %v1415
    %v1426 = vadd.f32 %v1394, %v1424
    %v1427 = vsel %vm1395, %v1397, %v1425
    %v1428 = vsel %vm1396, %v1398, %v1426
    %v1429 = vsel %vm1392, %v1427, %v1385
    %v1430 = vsel %vm1392, %v1428, %v1388
    %1431 = vst [vmem:[#allocation2] sm:$0xff] %v1429
    %1432 = vst [vmem:[#allocation2 + $0x8] sm:$0xff] %v1430
    // Predicated region
    $region22: #{tpu_custom_call.1} parent=1 // pred_check
      _
    $region23: #{tpu_custom_call.1} parent=1 // pred_check_branch
      %1434 = sbr.rel (0) target = $region25
    $region24: #{tpu_custom_call.1} parent=1 // pred_region
      %1436 = vsyncadd [#allocation3], 0
      %s1437 = sshll.u32 [#allocation2], 4
      %s1438 = int_to_ptr.vmem [resolvable:$true] %s1437
      %s1439 = sshll.u32 %s5, 4
      %s1440 = int_to_ptr.hbm [resolvable:$true] %s1439
      %1445 = dma.vmem_to_hbm [thread:$0]  %s1438, 256, %s1440, [#allocation3], 128, 128, 8
    $region25: #{tpu_custom_call.1} parent=1 // pred_fallthru
      _
    // Predicated region
    $region26: #{tpu_custom_call.1} parent=1 // pred_check
      _
    $region27: #{tpu_custom_call.1} parent=1 // pred_check_branch
      %1447 = sbr.rel (0) target = $region29
    $region28: #{tpu_custom_call.1} parent=1 // pred_region
      %1449 = dma.done [#allocation3], 256
    $region29: #{tpu_custom_call.1} parent=1 // pred_fallthru
      _
    %1450 = vsyncpa [#allocation3], 1

</llo_original>
